<compile_context>
chip_gen: v7x
topology: tpu7x:2x2x1
jax: 0.10.0
libtpu: 0.0.40
codegen_flags: <defaults>
</compile_context>

<pallas_src>
import functools

import jax
import jax.numpy as jnp
from jax import lax
from jax.experimental import pallas as pl
from jax.experimental.pallas import tpu as pltpu


# ----------------------------------------------------------------------------
# Fused forward kernel (single grid step, N = S*B rows)
# ----------------------------------------------------------------------------
def _fused_forward_kernel(
    x_ref,          # (N, I)      concatenated input factors, rows in (s, b) order
    mask_ref,       # (N, N)      additive block-diagonal attention mask (f32)
    pos_ref,        # (N, E)      positional encoding, expanded over batch
    enc_w_ref, enc_b_ref,                      # (I, E) bf16, (1, E) f32
    wqkv_ref, bqkv_ref,                        # (L, E, 3E) bf16, (L, 1, 3E) f32
    wo_ref, bo_ref,                            # (L, E, E) bf16, (L, 1, E) f32
    ln1w_ref, ln1b_ref, ln2w_ref, ln2b_ref,    # (L, 1, E) f32
    w1_ref, b1_ref, w2_ref, b2_ref,            # (L, E, F) bf16, (L, 1, F), (L, F, E) bf16, (L, 1, E)
    dec_w_ref, dec_b_ref,                      # (E, O_pad) bf16, (1, O_pad) f32
    o_ref,                                     # (N, O_pad) f32
    *, num_layers, num_heads, eps=1e-5,
):
    N, E = pos_ref.shape
    H = num_heads
    Dh = E // H
    attn_mask = mask_ref[...]                  # hoisted once (not rebuilt per layer)

    def layer_norm(t, w, b):
        mu = jnp.mean(t, axis=-1, keepdims=True)
        var = jnp.mean((t - mu) ** 2, axis=-1, keepdims=True)
        return (t - mu) * lax.rsqrt(var + eps) * w + b

    # ---- input encoder: ReLU(x @ W + b) + pos --------------------------------
    x = jnp.dot(x_ref[...].astype(jnp.bfloat16), enc_w_ref[...],
                preferred_element_type=jnp.float32)
    x = jnp.maximum(x + enc_b_ref[...], 0.0) + pos_ref[...]        # (N, E) f32

    # ---- post-norm TransformerEncoder layers (unrolled; num_layers is small) --
    for l in range(num_layers):
        # fused QKV projection: one (N, E) x (E, 3E) matmul (scale folded into q cols)
        qkv = jnp.dot(x.astype(jnp.bfloat16), wqkv_ref[l],
                      preferred_element_type=jnp.float32) + bqkv_ref[l]
        qkvb = qkv.astype(jnp.bfloat16)                             # (N, 3E)

        # per-head attention via static lane slices; heads collected then concatenated
        # (no serial accumulation chain, no redundant full-E contractions)
        ctx_heads = []
        for h in range(H):
            q_h = qkvb[:, h * Dh:(h + 1) * Dh]                      # (N, Dh)
            k_h = qkvb[:, E + h * Dh:E + (h + 1) * Dh]
            v_h = qkvb[:, 2 * E + h * Dh:2 * E + (h + 1) * Dh]
            scores = lax.dot_general(                               # q_h @ k_h^T
                q_h, k_h, (((1,), (1,)), ((), ())),
                preferred_element_type=jnp.float32) + attn_mask     # (N, N) f32
            mrow = jnp.max(scores, axis=-1, keepdims=True)
            p = jnp.exp(scores - mrow)
            p = p * pl.reciprocal(jnp.sum(p, axis=-1, keepdims=True), approx=False)
            ctx_heads.append(jnp.dot(p.astype(jnp.bfloat16), v_h,
                                     preferred_element_type=jnp.float32))
        ctx = jnp.concatenate(ctx_heads, axis=-1)                   # (N, E) f32

        # single out_proj matmul on concatenated heads
        attn_out = jnp.dot(ctx.astype(jnp.bfloat16), wo_ref[l],
                           preferred_element_type=jnp.float32) + bo_ref[l]
        x = layer_norm(x + attn_out, ln1w_ref[l], ln1b_ref[l])

        # feed-forward (relu)
        f = jnp.dot(x.astype(jnp.bfloat16), w1_ref[l],
                    preferred_element_type=jnp.float32) + b1_ref[l]
        f = jnp.maximum(f, 0.0)
        f = jnp.dot(f.astype(jnp.bfloat16), w2_ref[l],
                    preferred_element_type=jnp.float32) + b2_ref[l]
        x = layer_norm(x + f, ln2w_ref[l], ln2b_ref[l])

    # ---- fused decoder heads (output lane-padded to a 128 multiple) ----------
    out = jnp.dot(x.astype(jnp.bfloat16), dec_w_ref[...],
                  preferred_element_type=jnp.float32) + dec_b_ref[...]
    o_ref[...] = out.astype(o_ref.dtype)


# ----------------------------------------------------------------------------
# Wrapper: parameter re-layout (pure plumbing) + single pallas_call
# ----------------------------------------------------------------------------
def _full_spec(a):
    zeros = (0,) * a.ndim
    return pl.BlockSpec(a.shape, lambda i, _z=zeros: _z)


def factored_transformer_forward(sequences, mask, params, input_keys, num_heads):
    # concat factors along feature dim (PyTorch layout is seq-first: (S, B, F))
    x = jnp.concatenate([sequences[k] for k in input_keys], axis=-1)   # (S, B, I)
    S, B, I = x.shape
    N = S * B
    E = params["enc_w"].shape[0]
    L = len(params["layers"])
    H = num_heads
    Dh = E // H
    scale = 1.0 / float(Dh) ** 0.5

    x_flat = x.reshape(N, I)        # free row-major view; rows ordered r = s*B + b

    # --- block-diagonal attention mask over the folded (S*B) row dim ----------
    mask_f32 = mask.astype(jnp.float32)
    mask_rep = jnp.repeat(jnp.repeat(mask_f32, B, axis=0), B, axis=1)   # (N, N)
    bidx = jnp.arange(N) % B
    mask_big = jnp.where(bidx[:, None] == bidx[None, :], mask_rep, jnp.float32(-1e9))

    # --- parameter prep (layout plumbing only) --------------------------------
    enc_w = params["enc_w"].T.astype(jnp.bfloat16)                      # (I, E)
    enc_b = params["enc_b"].reshape(1, E).astype(jnp.float32)
    pos = jnp.repeat(params["pos"][:S, 0, :], B, axis=0)                # (N, E)

    def stack(fn, dtype=jnp.float32):
        return jnp.stack([fn(p) for p in params["layers"]], axis=0).astype(dtype)

    def qkv_w(p):                                  # (E, 3E), 1/sqrt(Dh) folded into q cols
        w = p["in_proj_w"].T
        return jnp.concatenate([w[:, :E] * scale, w[:, E:]], axis=1)

    def qkv_b(p):
        b = p["in_proj_b"]
        return jnp.concatenate([b[:E] * scale, b[E:]]).reshape(1, 3 * E)

    wqkv = stack(qkv_w, jnp.bfloat16)                                   # (L, E, 3E)
    bqkv = stack(qkv_b)                                                 # (L, 1, 3E)
    wo = stack(lambda p: p["out_proj_w"].T, jnp.bfloat16)               # (L, E, E)
    bo = stack(lambda p: p["out_proj_b"].reshape(1, E))
    ln1w = stack(lambda p: p["ln1_w"].reshape(1, E))
    ln1b = stack(lambda p: p["ln1_b"].reshape(1, E))
    ln2w = stack(lambda p: p["ln2_w"].reshape(1, E))
    ln2b = stack(lambda p: p["ln2_b"].reshape(1, E))
    w1 = stack(lambda p: p["ff1_w"].T, jnp.bfloat16)                    # (L, E, F)
    b1 = stack(lambda p: p["ff1_b"].reshape(1, -1))
    w2 = stack(lambda p: p["ff2_w"].T, jnp.bfloat16)                    # (L, F, E)
    b2 = stack(lambda p: p["ff2_b"].reshape(1, E))

    # fused decoders, zero-padded to a lane-dense (multiple of 128) output width
    dec_keys = list(params["decoders"].keys())
    dec_dims = [params["decoders"][k][0].shape[0] for k in dec_keys]
    o_total = sum(dec_dims)
    o_pad = pl.cdiv(o_total, 128) * 128
    dec_w = jnp.concatenate([params["decoders"][k][0].T for k in dec_keys], axis=1)
    dec_w = jnp.pad(dec_w, ((0, 0), (0, o_pad - o_total))).astype(jnp.bfloat16)
    dec_b = jnp.pad(jnp.concatenate([params["decoders"][k][1] for k in dec_keys]),
                    (0, o_pad - o_total)).reshape(1, o_pad).astype(jnp.float32)

    args = (x_flat, mask_big, pos, enc_w, enc_b, wqkv, bqkv, wo, bo,
            ln1w, ln1b, ln2w, ln2b, w1, b1, w2, b2, dec_w, dec_b)
    in_specs = [_full_spec(a) for a in args]

    out = pl.pallas_call(
        functools.partial(_fused_forward_kernel, num_layers=L, num_heads=H),
        out_shape=jax.ShapeDtypeStruct((N, o_pad), jnp.float32),
        grid=(1,),                                   # single step: all B*S rows per matmul
        in_specs=in_specs,
        out_specs=pl.BlockSpec((N, o_pad), lambda i: (0, 0)),
        compiler_params=pltpu.CompilerParams(
            dimension_semantics=("arbitrary",)),
    )(*args)

    out_sbo = out.reshape(S, B, o_pad)               # free row-major view
    outputs = {}
    off = 0
    for k_name, d in zip(dec_keys, dec_dims):
        outputs[k_name] = out_sbo[:, :, off:off + d]
        off += d
    return outputs


# ----------------------------------------------------------------------------
# Deterministic parameter initialization (shapes mirror the PyTorch module)
# ----------------------------------------------------------------------------
def init_params(key, input_dim, model_dim, num_hidden, num_layers, max_len, output_factors):
    keys = iter(jax.random.split(key, 128))

    def w(shape, scale):
        return jax.random.normal(next(keys), shape, jnp.float32) * scale

    params = {
        "enc_w": w((model_dim, input_dim), 0.1),
        "enc_b": w((model_dim,), 0.01),
        "pos": w((max_len, 1, model_dim), 0.02),     # position_encoding parameter
        "layers": [],
        "decoders": {},
    }
    for _ in range(num_layers):
        params["layers"].append({
            "in_proj_w": w((3 * model_dim, model_dim), 0.05),
            "in_proj_b": w((3 * model_dim,), 0.01),
            "out_proj_w": w((model_dim, model_dim), 0.05),
            "out_proj_b": w((model_dim,), 0.01),
            "ln1_w": jnp.ones((model_dim,), jnp.float32),
            "ln1_b": jnp.zeros((model_dim,), jnp.float32),
            "ff1_w": w((num_hidden, model_dim), 0.05),
            "ff1_b": w((num_hidden,), 0.01),
            "ff2_w": w((model_dim, num_hidden), 0.05),
            "ff2_b": w((model_dim,), 0.01),
            "ln2_w": jnp.ones((model_dim,), jnp.float32),
            "ln2_b": jnp.zeros((model_dim,), jnp.float32),
        })
    for name, dim in output_factors.items():
        params["decoders"][name] = (w((dim, model_dim), 0.05), w((dim,), 0.01))
    return params


# ----------------------------------------------------------------------------
if __name__ == "__main__":
    key = jax.random.PRNGKey(0)

    # factor dims (PyTorch module only uses factor.shape[0])
    input_factors = {"observation": 6, "action": 3}       # input_dim = 9
    output_factors = {"action": 3, "return": 1}

    S, B = 8, 2
    model_dim, num_layers, num_heads, num_hidden, max_len = 32, 2, 4, 64, 16
    input_dim = sum(input_factors.values())

    pkey, dkey = jax.random.split(key)
    params = init_params(pkey, input_dim, model_dim, num_hidden,
                         num_layers, max_len, output_factors)

    dkeys = jax.random.split(dkey, len(input_factors))
    sequences = {
        name: jax.random.normal(dk, (S, B, dim), jnp.float32)
        for dk, (name, dim) in zip(dkeys, input_factors.items())
    }
    # causal additive attention mask (finite large-negative instead of -inf)
    mask = jnp.where(jnp.arange(S)[:, None] >= jnp.arange(S)[None, :],
                     0.0, -1e9).astype(jnp.float32)

    out = factored_transformer_forward(
        sequences, mask, params, list(input_factors.keys()), num_heads)
    out = jax.block_until_ready(out)

    for name, dim in output_factors.items():
        assert out[name].shape == (S, B, dim), (name, out[name].shape)
        assert bool(jnp.all(jnp.isfinite(out[name]))), name

    print("KERNEL_OK")
</pallas_src>

<mosaic_0001>
module attributes {stable_mosaic.version = 11 : i64} {
  func.func @_fused_forward_kernel(%arg0: i32, %arg1: memref<16x9xf32, #tpu.memory_space<vmem>>, %arg2: memref<16x16xf32, #tpu.memory_space<vmem>>, %arg3: memref<16x32xf32, #tpu.memory_space<vmem>>, %arg4: memref<9x32xbf16, #tpu.memory_space<vmem>>, %arg5: memref<1x32xf32, #tpu.memory_space<vmem>>, %arg6: memref<2x32x96xbf16, #tpu.memory_space<vmem>>, %arg7: memref<2x1x96xf32, #tpu.memory_space<vmem>>, %arg8: memref<2x32x32xbf16, #tpu.memory_space<vmem>>, %arg9: memref<2x1x32xf32, #tpu.memory_space<vmem>>, %arg10: memref<2x1x32xf32, #tpu.memory_space<vmem>>, %arg11: memref<2x1x32xf32, #tpu.memory_space<vmem>>, %arg12: memref<2x1x32xf32, #tpu.memory_space<vmem>>, %arg13: memref<2x1x32xf32, #tpu.memory_space<vmem>>, %arg14: memref<2x32x64xbf16, #tpu.memory_space<vmem>>, %arg15: memref<2x1x64xf32, #tpu.memory_space<vmem>>, %arg16: memref<2x64x32xbf16, #tpu.memory_space<vmem>>, %arg17: memref<2x1x32xf32, #tpu.memory_space<vmem>>, %arg18: memref<32x128xbf16, #tpu.memory_space<vmem>>, %arg19: memref<1x128xf32, #tpu.memory_space<vmem>>, %arg20: memref<16x128xf32, #tpu.memory_space<vmem>>) attributes {dimension_semantics = [#tpu.dimension_semantics<arbitrary>], iteration_bounds = array<i64: 1>, scalar_prefetch = 0 : i64, scratch_operands = 0 : i64, tpu.core_type = #tpu.core_type<tc>, window_params = [{pipeline_mode = #tpu.pipeline_mode<synchronous>, transform_indices = @transform_0, window_bounds = array<i64: 16, 9>}, {pipeline_mode = #tpu.pipeline_mode<synchronous>, transform_indices = @transform_1, window_bounds = array<i64: 16, 16>}, {pipeline_mode = #tpu.pipeline_mode<synchronous>, transform_indices = @transform_2, window_bounds = array<i64: 16, 32>}, {pipeline_mode = #tpu.pipeline_mode<synchronous>, transform_indices = @transform_3, window_bounds = array<i64: 9, 32>}, {pipeline_mode = #tpu.pipeline_mode<synchronous>, transform_indices = @transform_4, window_bounds = array<i64: 1, 32>}, {pipeline_mode = #tpu.pipeline_mode<synchronous>, transform_indices = @transform_5, window_bounds = array<i64: 2, 32, 96>}, {pipeline_mode = #tpu.pipeline_mode<synchronous>, transform_indices = @transform_6, window_bounds = array<i64: 2, 1, 96>}, {pipeline_mode = #tpu.pipeline_mode<synchronous>, transform_indices = @transform_7, window_bounds = array<i64: 2, 32, 32>}, {pipeline_mode = #tpu.pipeline_mode<synchronous>, transform_indices = @transform_8, window_bounds = array<i64: 2, 1, 32>}, {pipeline_mode = #tpu.pipeline_mode<synchronous>, transform_indices = @transform_9, window_bounds = array<i64: 2, 1, 32>}, {pipeline_mode = #tpu.pipeline_mode<synchronous>, transform_indices = @transform_10, window_bounds = array<i64: 2, 1, 32>}, {pipeline_mode = #tpu.pipeline_mode<synchronous>, transform_indices = @transform_11, window_bounds = array<i64: 2, 1, 32>}, {pipeline_mode = #tpu.pipeline_mode<synchronous>, transform_indices = @transform_12, window_bounds = array<i64: 2, 1, 32>}, {pipeline_mode = #tpu.pipeline_mode<synchronous>, transform_indices = @transform_13, window_bounds = array<i64: 2, 32, 64>}, {pipeline_mode = #tpu.pipeline_mode<synchronous>, transform_indices = @transform_14, window_bounds = array<i64: 2, 1, 64>}, {pipeline_mode = #tpu.pipeline_mode<synchronous>, transform_indices = @transform_15, window_bounds = array<i64: 2, 64, 32>}, {pipeline_mode = #tpu.pipeline_mode<synchronous>, transform_indices = @transform_16, window_bounds = array<i64: 2, 1, 32>}, {pipeline_mode = #tpu.pipeline_mode<synchronous>, transform_indices = @transform_17, window_bounds = array<i64: 32, 128>}, {pipeline_mode = #tpu.pipeline_mode<synchronous>, transform_indices = @transform_18, window_bounds = array<i64: 1, 128>}, {pipeline_mode = #tpu.pipeline_mode<synchronous>, transform_indices = @transform_19, window_bounds = array<i64: 16, 128>}]} {
    %c0 = arith.constant 0 : index
    %c0_0 = arith.constant 0 : index
    %0 = vector.load %arg2[%c0, %c0_0] : memref<16x16xf32, #tpu.memory_space<vmem>>, vector<16x16xf32>
    %c0_1 = arith.constant 0 : index
    %c0_2 = arith.constant 0 : index
    %1 = vector.load %arg1[%c0_1, %c0_2] : memref<16x9xf32, #tpu.memory_space<vmem>>, vector<16x9xf32>
    %2 = arith.truncf %1 : vector<16x9xf32> to vector<16x9xbf16>
    %c0_3 = arith.constant 0 : index
    %c0_4 = arith.constant 0 : index
    %3 = vector.load %arg4[%c0_3, %c0_4] : memref<9x32xbf16, #tpu.memory_space<vmem>>, vector<9x32xbf16>
    %cst = arith.constant dense<0.000000e+00> : vector<16x32xf32>
    %4 = tpu.matmul %2, %3, %cst {dimension_numbers = #tpu.dot_dimension_numbers<[1], [0], [0], [1], [0, 0, 1, 1], [], []>} : vector<16x9xbf16>, vector<9x32xbf16>, vector<16x32xf32> -> vector<16x32xf32>
    %c0_5 = arith.constant 0 : index
    %c0_6 = arith.constant 0 : index
    %5 = vector.load %arg5[%c0_5, %c0_6] : memref<1x32xf32, #tpu.memory_space<vmem>>, vector<1x32xf32>
    %6 = vector.broadcast %5 : vector<1x32xf32> to vector<16x32xf32>
    %7 = arith.addf %4, %6 : vector<16x32xf32>
    %cst_7 = arith.constant 0.000000e+00 : f32
    %8 = vector.broadcast %cst_7 : f32 to vector<16x32xf32>
    %9 = arith.maximumf %7, %8 : vector<16x32xf32>
    %c0_8 = arith.constant 0 : index
    %c0_9 = arith.constant 0 : index
    %10 = vector.load %arg3[%c0_8, %c0_9] : memref<16x32xf32, #tpu.memory_space<vmem>>, vector<16x32xf32>
    %11 = arith.addf %9, %10 : vector<16x32xf32>
    %12 = arith.truncf %11 : vector<16x32xf32> to vector<16x32xbf16>
    %c0_10 = arith.constant 0 : index
    %c0_11 = arith.constant 0 : index
    %c0_12 = arith.constant 0 : index
    %13 = vector.load %arg6[%c0_10, %c0_11, %c0_12] : memref<2x32x96xbf16, #tpu.memory_space<vmem>>, vector<1x32x96xbf16>
    %14 = vector.shape_cast %13 : vector<1x32x96xbf16> to vector<32x96xbf16>
    %cst_13 = arith.constant dense<0.000000e+00> : vector<16x96xf32>
    %15 = tpu.matmul %12, %14, %cst_13 {dimension_numbers = #tpu.dot_dimension_numbers<[1], [0], [0], [1], [0, 0, 1, 1], [], []>} : vector<16x32xbf16>, vector<32x96xbf16>, vector<16x96xf32> -> vector<16x96xf32>
    %c0_14 = arith.constant 0 : index
    %c0_15 = arith.constant 0 : index
    %c0_16 = arith.constant 0 : index
    %16 = vector.load %arg7[%c0_14, %c0_15, %c0_16] : memref<2x1x96xf32, #tpu.memory_space<vmem>>, vector<1x1x96xf32>
    %17 = vector.shape_cast %16 : vector<1x1x96xf32> to vector<1x96xf32>
    %18 = vector.broadcast %17 : vector<1x96xf32> to vector<16x96xf32>
    %19 = arith.addf %15, %18 : vector<16x96xf32>
    %20 = arith.truncf %19 : vector<16x96xf32> to vector<16x96xbf16>
    %21 = vector.extract_strided_slice %20 {offsets = [0, 0], sizes = [16, 8], strides = [1, 1]} : vector<16x96xbf16> to vector<16x8xbf16>
    %22 = vector.extract_strided_slice %20 {offsets = [0, 32], sizes = [16, 8], strides = [1, 1]} : vector<16x96xbf16> to vector<16x8xbf16>
    %23 = vector.extract_strided_slice %20 {offsets = [0, 64], sizes = [16, 8], strides = [1, 1]} : vector<16x96xbf16> to vector<16x8xbf16>
    %cst_17 = arith.constant dense<0.000000e+00> : vector<16x16xf32>
    %24 = tpu.matmul %21, %22, %cst_17 {dimension_numbers = #tpu.dot_dimension_numbers<[1], [1], [0], [0], [0, 0, 1, 0], [], []>} : vector<16x8xbf16>, vector<16x8xbf16>, vector<16x16xf32> -> vector<16x16xf32>
    %25 = arith.addf %24, %0 : vector<16x16xf32>
    %cst_18 = arith.constant dense<0xFF800000> : vector<16xf32>
    %26 = vector.multi_reduction <maximumf>, %25, %cst_18 [1] : vector<16x16xf32> to vector<16xf32>
    %27 = vector.shape_cast %26 : vector<16xf32> to vector<16x1xf32>
    %28 = vector.broadcast %27 : vector<16x1xf32> to vector<16x16xf32>
    %29 = arith.subf %25, %28 : vector<16x16xf32>
    %30 = math.exp %29 : vector<16x16xf32>
    %cst_19 = arith.constant dense<0.000000e+00> : vector<16xf32>
    %31 = vector.multi_reduction <add>, %30, %cst_19 [1] : vector<16x16xf32> to vector<16xf32>
    %32 = vector.shape_cast %31 : vector<16xf32> to vector<16x1xf32>
    %33 = tpu.reciprocal %32 : vector<16x1xf32> -> vector<16x1xf32>
    %34 = vector.broadcast %33 : vector<16x1xf32> to vector<16x16xf32>
    %35 = arith.mulf %30, %34 : vector<16x16xf32>
    %36 = arith.truncf %35 : vector<16x16xf32> to vector<16x16xbf16>
    %cst_20 = arith.constant dense<0.000000e+00> : vector<16x8xf32>
    %37 = tpu.matmul %36, %23, %cst_20 {dimension_numbers = #tpu.dot_dimension_numbers<[1], [0], [0], [1], [0, 0, 1, 1], [], []>} : vector<16x16xbf16>, vector<16x8xbf16>, vector<16x8xf32> -> vector<16x8xf32>
    %38 = vector.extract_strided_slice %20 {offsets = [0, 8], sizes = [16, 8], strides = [1, 1]} : vector<16x96xbf16> to vector<16x8xbf16>
    %39 = vector.extract_strided_slice %20 {offsets = [0, 40], sizes = [16, 8], strides = [1, 1]} : vector<16x96xbf16> to vector<16x8xbf16>
    %40 = vector.extract_strided_slice %20 {offsets = [0, 72], sizes = [16, 8], strides = [1, 1]} : vector<16x96xbf16> to vector<16x8xbf16>
    %cst_21 = arith.constant dense<0.000000e+00> : vector<16x16xf32>
    %41 = tpu.matmul %38, %39, %cst_21 {dimension_numbers = #tpu.dot_dimension_numbers<[1], [1], [0], [0], [0, 0, 1, 0], [], []>} : vector<16x8xbf16>, vector<16x8xbf16>, vector<16x16xf32> -> vector<16x16xf32>
    %42 = arith.addf %41, %0 : vector<16x16xf32>
    %cst_22 = arith.constant dense<0xFF800000> : vector<16xf32>
    %43 = vector.multi_reduction <maximumf>, %42, %cst_22 [1] : vector<16x16xf32> to vector<16xf32>
    %44 = vector.shape_cast %43 : vector<16xf32> to vector<16x1xf32>
    %45 = vector.broadcast %44 : vector<16x1xf32> to vector<16x16xf32>
    %46 = arith.subf %42, %45 : vector<16x16xf32>
    %47 = math.exp %46 : vector<16x16xf32>
    %cst_23 = arith.constant dense<0.000000e+00> : vector<16xf32>
    %48 = vector.multi_reduction <add>, %47, %cst_23 [1] : vector<16x16xf32> to vector<16xf32>
    %49 = vector.shape_cast %48 : vector<16xf32> to vector<16x1xf32>
    %50 = tpu.reciprocal %49 : vector<16x1xf32> -> vector<16x1xf32>
    %51 = vector.broadcast %50 : vector<16x1xf32> to vector<16x16xf32>
    %52 = arith.mulf %47, %51 : vector<16x16xf32>
    %53 = arith.truncf %52 : vector<16x16xf32> to vector<16x16xbf16>
    %cst_24 = arith.constant dense<0.000000e+00> : vector<16x8xf32>
    %54 = tpu.matmul %53, %40, %cst_24 {dimension_numbers = #tpu.dot_dimension_numbers<[1], [0], [0], [1], [0, 0, 1, 1], [], []>} : vector<16x16xbf16>, vector<16x8xbf16>, vector<16x8xf32> -> vector<16x8xf32>
    %55 = vector.extract_strided_slice %20 {offsets = [0, 16], sizes = [16, 8], strides = [1, 1]} : vector<16x96xbf16> to vector<16x8xbf16>
    %56 = vector.extract_strided_slice %20 {offsets = [0, 48], sizes = [16, 8], strides = [1, 1]} : vector<16x96xbf16> to vector<16x8xbf16>
    %57 = vector.extract_strided_slice %20 {offsets = [0, 80], sizes = [16, 8], strides = [1, 1]} : vector<16x96xbf16> to vector<16x8xbf16>
    %cst_25 = arith.constant dense<0.000000e+00> : vector<16x16xf32>
    %58 = tpu.matmul %55, %56, %cst_25 {dimension_numbers = #tpu.dot_dimension_numbers<[1], [1], [0], [0], [0, 0, 1, 0], [], []>} : vector<16x8xbf16>, vector<16x8xbf16>, vector<16x16xf32> -> vector<16x16xf32>
    %59 = arith.addf %58, %0 : vector<16x16xf32>
    %cst_26 = arith.constant dense<0xFF800000> : vector<16xf32>
    %60 = vector.multi_reduction <maximumf>, %59, %cst_26 [1] : vector<16x16xf32> to vector<16xf32>
    %61 = vector.shape_cast %60 : vector<16xf32> to vector<16x1xf32>
    %62 = vector.broadcast %61 : vector<16x1xf32> to vector<16x16xf32>
    %63 = arith.subf %59, %62 : vector<16x16xf32>
    %64 = math.exp %63 : vector<16x16xf32>
    %cst_27 = arith.constant dense<0.000000e+00> : vector<16xf32>
    %65 = vector.multi_reduction <add>, %64, %cst_27 [1] : vector<16x16xf32> to vector<16xf32>
    %66 = vector.shape_cast %65 : vector<16xf32> to vector<16x1xf32>
    %67 = tpu.reciprocal %66 : vector<16x1xf32> -> vector<16x1xf32>
    %68 = vector.broadcast %67 : vector<16x1xf32> to vector<16x16xf32>
    %69 = arith.mulf %64, %68 : vector<16x16xf32>
    %70 = arith.truncf %69 : vector<16x16xf32> to vector<16x16xbf16>
    %cst_28 = arith.constant dense<0.000000e+00> : vector<16x8xf32>
    %71 = tpu.matmul %70, %57, %cst_28 {dimension_numbers = #tpu.dot_dimension_numbers<[1], [0], [0], [1], [0, 0, 1, 1], [], []>} : vector<16x16xbf16>, vector<16x8xbf16>, vector<16x8xf32> -> vector<16x8xf32>
    %72 = vector.extract_strided_slice %20 {offsets = [0, 24], sizes = [16, 8], strides = [1, 1]} : vector<16x96xbf16> to vector<16x8xbf16>
    %73 = vector.extract_strided_slice %20 {offsets = [0, 56], sizes = [16, 8], strides = [1, 1]} : vector<16x96xbf16> to vector<16x8xbf16>
    %74 = vector.extract_strided_slice %20 {offsets = [0, 88], sizes = [16, 8], strides = [1, 1]} : vector<16x96xbf16> to vector<16x8xbf16>
    %cst_29 = arith.constant dense<0.000000e+00> : vector<16x16xf32>
    %75 = tpu.matmul %72, %73, %cst_29 {dimension_numbers = #tpu.dot_dimension_numbers<[1], [1], [0], [0], [0, 0, 1, 0], [], []>} : vector<16x8xbf16>, vector<16x8xbf16>, vector<16x16xf32> -> vector<16x16xf32>
    %76 = arith.addf %75, %0 : vector<16x16xf32>
    %cst_30 = arith.constant dense<0xFF800000> : vector<16xf32>
    %77 = vector.multi_reduction <maximumf>, %76, %cst_30 [1] : vector<16x16xf32> to vector<16xf32>
    %78 = vector.shape_cast %77 : vector<16xf32> to vector<16x1xf32>
    %79 = vector.broadcast %78 : vector<16x1xf32> to vector<16x16xf32>
    %80 = arith.subf %76, %79 : vector<16x16xf32>
    %81 = math.exp %80 : vector<16x16xf32>
    %cst_31 = arith.constant dense<0.000000e+00> : vector<16xf32>
    %82 = vector.multi_reduction <add>, %81, %cst_31 [1] : vector<16x16xf32> to vector<16xf32>
    %83 = vector.shape_cast %82 : vector<16xf32> to vector<16x1xf32>
    %84 = tpu.reciprocal %83 : vector<16x1xf32> -> vector<16x1xf32>
    %85 = vector.broadcast %84 : vector<16x1xf32> to vector<16x16xf32>
    %86 = arith.mulf %81, %85 : vector<16x16xf32>
    %87 = arith.truncf %86 : vector<16x16xf32> to vector<16x16xbf16>
    %cst_32 = arith.constant dense<0.000000e+00> : vector<16x8xf32>
    %88 = tpu.matmul %87, %74, %cst_32 {dimension_numbers = #tpu.dot_dimension_numbers<[1], [0], [0], [1], [0, 0, 1, 1], [], []>} : vector<16x16xbf16>, vector<16x8xbf16>, vector<16x8xf32> -> vector<16x8xf32>
    %89 = tpu.concatenate %37, %54, %71, %88 in 1 : vector<16x8xf32>, vector<16x8xf32>, vector<16x8xf32>, vector<16x8xf32> -> vector<16x32xf32>
    %90 = arith.truncf %89 : vector<16x32xf32> to vector<16x32xbf16>
    %c0_33 = arith.constant 0 : index
    %c0_34 = arith.constant 0 : index
    %c0_35 = arith.constant 0 : index
    %91 = vector.load %arg8[%c0_33, %c0_34, %c0_35] : memref<2x32x32xbf16, #tpu.memory_space<vmem>>, vector<1x32x32xbf16>
    %92 = vector.shape_cast %91 : vector<1x32x32xbf16> to vector<32x32xbf16>
    %cst_36 = arith.constant dense<0.000000e+00> : vector<16x32xf32>
    %93 = tpu.matmul %90, %92, %cst_36 {dimension_numbers = #tpu.dot_dimension_numbers<[1], [0], [0], [1], [0, 0, 1, 1], [], []>} : vector<16x32xbf16>, vector<32x32xbf16>, vector<16x32xf32> -> vector<16x32xf32>
    %c0_37 = arith.constant 0 : index
    %c0_38 = arith.constant 0 : index
    %c0_39 = arith.constant 0 : index
    %94 = vector.load %arg9[%c0_37, %c0_38, %c0_39] : memref<2x1x32xf32, #tpu.memory_space<vmem>>, vector<1x1x32xf32>
    %95 = vector.shape_cast %94 : vector<1x1x32xf32> to vector<1x32xf32>
    %96 = vector.broadcast %95 : vector<1x32xf32> to vector<16x32xf32>
    %97 = arith.addf %93, %96 : vector<16x32xf32>
    %98 = arith.addf %11, %97 : vector<16x32xf32>
    %c0_40 = arith.constant 0 : index
    %c0_41 = arith.constant 0 : index
    %c0_42 = arith.constant 0 : index
    %99 = vector.load %arg10[%c0_40, %c0_41, %c0_42] : memref<2x1x32xf32, #tpu.memory_space<vmem>>, vector<1x1x32xf32>
    %100 = vector.shape_cast %99 : vector<1x1x32xf32> to vector<1x32xf32>
    %c0_43 = arith.constant 0 : index
    %c0_44 = arith.constant 0 : index
    %c0_45 = arith.constant 0 : index
    %101 = vector.load %arg11[%c0_43, %c0_44, %c0_45] : memref<2x1x32xf32, #tpu.memory_space<vmem>>, vector<1x1x32xf32>
    %102 = vector.shape_cast %101 : vector<1x1x32xf32> to vector<1x32xf32>
    %cst_46 = arith.constant dense<0.000000e+00> : vector<16xf32>
    %103 = vector.multi_reduction <add>, %98, %cst_46 [1] : vector<16x32xf32> to vector<16xf32>
    %104 = vector.shape_cast %103 : vector<16xf32> to vector<16x1xf32>
    %cst_47 = arith.constant 3.200000e+01 : f32
    %105 = vector.broadcast %cst_47 : f32 to vector<16x1xf32>
    %106 = arith.divf %104, %105 : vector<16x1xf32>
    %107 = vector.broadcast %106 : vector<16x1xf32> to vector<16x32xf32>
    %108 = arith.subf %98, %107 : vector<16x32xf32>
    %109 = arith.mulf %108, %108 : vector<16x32xf32>
    %cst_48 = arith.constant dense<0.000000e+00> : vector<16xf32>
    %110 = vector.multi_reduction <add>, %109, %cst_48 [1] : vector<16x32xf32> to vector<16xf32>
    %111 = vector.shape_cast %110 : vector<16xf32> to vector<16x1xf32>
    %cst_49 = arith.constant 3.200000e+01 : f32
    %112 = vector.broadcast %cst_49 : f32 to vector<16x1xf32>
    %113 = arith.divf %111, %112 : vector<16x1xf32>
    %114 = vector.broadcast %106 : vector<16x1xf32> to vector<16x32xf32>
    %115 = arith.subf %98, %114 : vector<16x32xf32>
    %cst_50 = arith.constant 9.99999974E-6 : f32
    %116 = vector.broadcast %cst_50 : f32 to vector<16x1xf32>
    %117 = arith.addf %113, %116 : vector<16x1xf32>
    %118 = math.rsqrt %117 : vector<16x1xf32>
    %119 = vector.broadcast %118 : vector<16x1xf32> to vector<16x32xf32>
    %120 = arith.mulf %115, %119 : vector<16x32xf32>
    %121 = vector.broadcast %100 : vector<1x32xf32> to vector<16x32xf32>
    %122 = arith.mulf %120, %121 : vector<16x32xf32>
    %123 = vector.broadcast %102 : vector<1x32xf32> to vector<16x32xf32>
    %124 = arith.addf %122, %123 : vector<16x32xf32>
    %125 = arith.truncf %124 : vector<16x32xf32> to vector<16x32xbf16>
    %c0_51 = arith.constant 0 : index
    %c0_52 = arith.constant 0 : index
    %c0_53 = arith.constant 0 : index
    %126 = vector.load %arg14[%c0_51, %c0_52, %c0_53] : memref<2x32x64xbf16, #tpu.memory_space<vmem>>, vector<1x32x64xbf16>
    %127 = vector.shape_cast %126 : vector<1x32x64xbf16> to vector<32x64xbf16>
    %cst_54 = arith.constant dense<0.000000e+00> : vector<16x64xf32>
    %128 = tpu.matmul %125, %127, %cst_54 {dimension_numbers = #tpu.dot_dimension_numbers<[1], [0], [0], [1], [0, 0, 1, 1], [], []>} : vector<16x32xbf16>, vector<32x64xbf16>, vector<16x64xf32> -> vector<16x64xf32>
    %c0_55 = arith.constant 0 : index
    %c0_56 = arith.constant 0 : index
    %c0_57 = arith.constant 0 : index
    %129 = vector.load %arg15[%c0_55, %c0_56, %c0_57] : memref<2x1x64xf32, #tpu.memory_space<vmem>>, vector<1x1x64xf32>
    %130 = vector.shape_cast %129 : vector<1x1x64xf32> to vector<1x64xf32>
    %131 = vector.broadcast %130 : vector<1x64xf32> to vector<16x64xf32>
    %132 = arith.addf %128, %131 : vector<16x64xf32>
    %cst_58 = arith.constant 0.000000e+00 : f32
    %133 = vector.broadcast %cst_58 : f32 to vector<16x64xf32>
    %134 = arith.maximumf %132, %133 : vector<16x64xf32>
    %135 = arith.truncf %134 : vector<16x64xf32> to vector<16x64xbf16>
    %c0_59 = arith.constant 0 : index
    %c0_60 = arith.constant 0 : index
    %c0_61 = arith.constant 0 : index
    %136 = vector.load %arg16[%c0_59, %c0_60, %c0_61] : memref<2x64x32xbf16, #tpu.memory_space<vmem>>, vector<1x64x32xbf16>
    %137 = vector.shape_cast %136 : vector<1x64x32xbf16> to vector<64x32xbf16>
    %cst_62 = arith.constant dense<0.000000e+00> : vector<16x32xf32>
    %138 = tpu.matmul %135, %137, %cst_62 {dimension_numbers = #tpu.dot_dimension_numbers<[1], [0], [0], [1], [0, 0, 1, 1], [], []>} : vector<16x64xbf16>, vector<64x32xbf16>, vector<16x32xf32> -> vector<16x32xf32>
    %c0_63 = arith.constant 0 : index
    %c0_64 = arith.constant 0 : index
    %c0_65 = arith.constant 0 : index
    %139 = vector.load %arg17[%c0_63, %c0_64, %c0_65] : memref<2x1x32xf32, #tpu.memory_space<vmem>>, vector<1x1x32xf32>
    %140 = vector.shape_cast %139 : vector<1x1x32xf32> to vector<1x32xf32>
    %141 = vector.broadcast %140 : vector<1x32xf32> to vector<16x32xf32>
    %142 = arith.addf %138, %141 : vector<16x32xf32>
    %143 = arith.addf %124, %142 : vector<16x32xf32>
    %c0_66 = arith.constant 0 : index
    %c0_67 = arith.constant 0 : index
    %c0_68 = arith.constant 0 : index
    %144 = vector.load %arg12[%c0_66, %c0_67, %c0_68] : memref<2x1x32xf32, #tpu.memory_space<vmem>>, vector<1x1x32xf32>
    %145 = vector.shape_cast %144 : vector<1x1x32xf32> to vector<1x32xf32>
    %c0_69 = arith.constant 0 : index
    %c0_70 = arith.constant 0 : index
    %c0_71 = arith.constant 0 : index
    %146 = vector.load %arg13[%c0_69, %c0_70, %c0_71] : memref<2x1x32xf32, #tpu.memory_space<vmem>>, vector<1x1x32xf32>
    %147 = vector.shape_cast %146 : vector<1x1x32xf32> to vector<1x32xf32>
    %cst_72 = arith.constant dense<0.000000e+00> : vector<16xf32>
    %148 = vector.multi_reduction <add>, %143, %cst_72 [1] : vector<16x32xf32> to vector<16xf32>
    %149 = vector.shape_cast %148 : vector<16xf32> to vector<16x1xf32>
    %cst_73 = arith.constant 3.200000e+01 : f32
    %150 = vector.broadcast %cst_73 : f32 to vector<16x1xf32>
    %151 = arith.divf %149, %150 : vector<16x1xf32>
    %152 = vector.broadcast %151 : vector<16x1xf32> to vector<16x32xf32>
    %153 = arith.subf %143, %152 : vector<16x32xf32>
    %154 = arith.mulf %153, %153 : vector<16x32xf32>
    %cst_74 = arith.constant dense<0.000000e+00> : vector<16xf32>
    %155 = vector.multi_reduction <add>, %154, %cst_74 [1] : vector<16x32xf32> to vector<16xf32>
    %156 = vector.shape_cast %155 : vector<16xf32> to vector<16x1xf32>
    %cst_75 = arith.constant 3.200000e+01 : f32
    %157 = vector.broadcast %cst_75 : f32 to vector<16x1xf32>
    %158 = arith.divf %156, %157 : vector<16x1xf32>
    %159 = vector.broadcast %151 : vector<16x1xf32> to vector<16x32xf32>
    %160 = arith.subf %143, %159 : vector<16x32xf32>
    %cst_76 = arith.constant 9.99999974E-6 : f32
    %161 = vector.broadcast %cst_76 : f32 to vector<16x1xf32>
    %162 = arith.addf %158, %161 : vector<16x1xf32>
    %163 = math.rsqrt %162 : vector<16x1xf32>
    %164 = vector.broadcast %163 : vector<16x1xf32> to vector<16x32xf32>
    %165 = arith.mulf %160, %164 : vector<16x32xf32>
    %166 = vector.broadcast %145 : vector<1x32xf32> to vector<16x32xf32>
    %167 = arith.mulf %165, %166 : vector<16x32xf32>
    %168 = vector.broadcast %147 : vector<1x32xf32> to vector<16x32xf32>
    %169 = arith.addf %167, %168 : vector<16x32xf32>
    %170 = arith.truncf %169 : vector<16x32xf32> to vector<16x32xbf16>
    %c1 = arith.constant 1 : index
    %c0_77 = arith.constant 0 : index
    %c0_78 = arith.constant 0 : index
    %171 = vector.load %arg6[%c1, %c0_77, %c0_78] : memref<2x32x96xbf16, #tpu.memory_space<vmem>>, vector<1x32x96xbf16>
    %172 = vector.shape_cast %171 : vector<1x32x96xbf16> to vector<32x96xbf16>
    %cst_79 = arith.constant dense<0.000000e+00> : vector<16x96xf32>
    %173 = tpu.matmul %170, %172, %cst_79 {dimension_numbers = #tpu.dot_dimension_numbers<[1], [0], [0], [1], [0, 0, 1, 1], [], []>} : vector<16x32xbf16>, vector<32x96xbf16>, vector<16x96xf32> -> vector<16x96xf32>
    %c1_80 = arith.constant 1 : index
    %c0_81 = arith.constant 0 : index
    %c0_82 = arith.constant 0 : index
    %174 = vector.load %arg7[%c1_80, %c0_81, %c0_82] : memref<2x1x96xf32, #tpu.memory_space<vmem>>, vector<1x1x96xf32>
    %175 = vector.shape_cast %174 : vector<1x1x96xf32> to vector<1x96xf32>
    %176 = vector.broadcast %175 : vector<1x96xf32> to vector<16x96xf32>
    %177 = arith.addf %173, %176 : vector<16x96xf32>
    %178 = arith.truncf %177 : vector<16x96xf32> to vector<16x96xbf16>
    %179 = vector.extract_strided_slice %178 {offsets = [0, 0], sizes = [16, 8], strides = [1, 1]} : vector<16x96xbf16> to vector<16x8xbf16>
    %180 = vector.extract_strided_slice %178 {offsets = [0, 32], sizes = [16, 8], strides = [1, 1]} : vector<16x96xbf16> to vector<16x8xbf16>
    %181 = vector.extract_strided_slice %178 {offsets = [0, 64], sizes = [16, 8], strides = [1, 1]} : vector<16x96xbf16> to vector<16x8xbf16>
    %cst_83 = arith.constant dense<0.000000e+00> : vector<16x16xf32>
    %182 = tpu.matmul %179, %180, %cst_83 {dimension_numbers = #tpu.dot_dimension_numbers<[1], [1], [0], [0], [0, 0, 1, 0], [], []>} : vector<16x8xbf16>, vector<16x8xbf16>, vector<16x16xf32> -> vector<16x16xf32>
    %183 = arith.addf %182, %0 : vector<16x16xf32>
    %cst_84 = arith.constant dense<0xFF800000> : vector<16xf32>
    %184 = vector.multi_reduction <maximumf>, %183, %cst_84 [1] : vector<16x16xf32> to vector<16xf32>
    %185 = vector.shape_cast %184 : vector<16xf32> to vector<16x1xf32>
    %186 = vector.broadcast %185 : vector<16x1xf32> to vector<16x16xf32>
    %187 = arith.subf %183, %186 : vector<16x16xf32>
    %188 = math.exp %187 : vector<16x16xf32>
    %cst_85 = arith.constant dense<0.000000e+00> : vector<16xf32>
    %189 = vector.multi_reduction <add>, %188, %cst_85 [1] : vector<16x16xf32> to vector<16xf32>
    %190 = vector.shape_cast %189 : vector<16xf32> to vector<16x1xf32>
    %191 = tpu.reciprocal %190 : vector<16x1xf32> -> vector<16x1xf32>
    %192 = vector.broadcast %191 : vector<16x1xf32> to vector<16x16xf32>
    %193 = arith.mulf %188, %192 : vector<16x16xf32>
    %194 = arith.truncf %193 : vector<16x16xf32> to vector<16x16xbf16>
    %cst_86 = arith.constant dense<0.000000e+00> : vector<16x8xf32>
    %195 = tpu.matmul %194, %181, %cst_86 {dimension_numbers = #tpu.dot_dimension_numbers<[1], [0], [0], [1], [0, 0, 1, 1], [], []>} : vector<16x16xbf16>, vector<16x8xbf16>, vector<16x8xf32> -> vector<16x8xf32>
    %196 = vector.extract_strided_slice %178 {offsets = [0, 8], sizes = [16, 8], strides = [1, 1]} : vector<16x96xbf16> to vector<16x8xbf16>
    %197 = vector.extract_strided_slice %178 {offsets = [0, 40], sizes = [16, 8], strides = [1, 1]} : vector<16x96xbf16> to vector<16x8xbf16>
    %198 = vector.extract_strided_slice %178 {offsets = [0, 72], sizes = [16, 8], strides = [1, 1]} : vector<16x96xbf16> to vector<16x8xbf16>
    %cst_87 = arith.constant dense<0.000000e+00> : vector<16x16xf32>
    %199 = tpu.matmul %196, %197, %cst_87 {dimension_numbers = #tpu.dot_dimension_numbers<[1], [1], [0], [0], [0, 0, 1, 0], [], []>} : vector<16x8xbf16>, vector<16x8xbf16>, vector<16x16xf32> -> vector<16x16xf32>
    %200 = arith.addf %199, %0 : vector<16x16xf32>
    %cst_88 = arith.constant dense<0xFF800000> : vector<16xf32>
    %201 = vector.multi_reduction <maximumf>, %200, %cst_88 [1] : vector<16x16xf32> to vector<16xf32>
    %202 = vector.shape_cast %201 : vector<16xf32> to vector<16x1xf32>
    %203 = vector.broadcast %202 : vector<16x1xf32> to vector<16x16xf32>
    %204 = arith.subf %200, %203 : vector<16x16xf32>
    %205 = math.exp %204 : vector<16x16xf32>
    %cst_89 = arith.constant dense<0.000000e+00> : vector<16xf32>
    %206 = vector.multi_reduction <add>, %205, %cst_89 [1] : vector<16x16xf32> to vector<16xf32>
    %207 = vector.shape_cast %206 : vector<16xf32> to vector<16x1xf32>
    %208 = tpu.reciprocal %207 : vector<16x1xf32> -> vector<16x1xf32>
    %209 = vector.broadcast %208 : vector<16x1xf32> to vector<16x16xf32>
    %210 = arith.mulf %205, %209 : vector<16x16xf32>
    %211 = arith.truncf %210 : vector<16x16xf32> to vector<16x16xbf16>
    %cst_90 = arith.constant dense<0.000000e+00> : vector<16x8xf32>
    %212 = tpu.matmul %211, %198, %cst_90 {dimension_numbers = #tpu.dot_dimension_numbers<[1], [0], [0], [1], [0, 0, 1, 1], [], []>} : vector<16x16xbf16>, vector<16x8xbf16>, vector<16x8xf32> -> vector<16x8xf32>
    %213 = vector.extract_strided_slice %178 {offsets = [0, 16], sizes = [16, 8], strides = [1, 1]} : vector<16x96xbf16> to vector<16x8xbf16>
    %214 = vector.extract_strided_slice %178 {offsets = [0, 48], sizes = [16, 8], strides = [1, 1]} : vector<16x96xbf16> to vector<16x8xbf16>
    %215 = vector.extract_strided_slice %178 {offsets = [0, 80], sizes = [16, 8], strides = [1, 1]} : vector<16x96xbf16> to vector<16x8xbf16>
    %cst_91 = arith.constant dense<0.000000e+00> : vector<16x16xf32>
    %216 = tpu.matmul %213, %214, %cst_91 {dimension_numbers = #tpu.dot_dimension_numbers<[1], [1], [0], [0], [0, 0, 1, 0], [], []>} : vector<16x8xbf16>, vector<16x8xbf16>, vector<16x16xf32> -> vector<16x16xf32>
    %217 = arith.addf %216, %0 : vector<16x16xf32>
    %cst_92 = arith.constant dense<0xFF800000> : vector<16xf32>
    %218 = vector.multi_reduction <maximumf>, %217, %cst_92 [1] : vector<16x16xf32> to vector<16xf32>
    %219 = vector.shape_cast %218 : vector<16xf32> to vector<16x1xf32>
    %220 = vector.broadcast %219 : vector<16x1xf32> to vector<16x16xf32>
    %221 = arith.subf %217, %220 : vector<16x16xf32>
    %222 = math.exp %221 : vector<16x16xf32>
    %cst_93 = arith.constant dense<0.000000e+00> : vector<16xf32>
    %223 = vector.multi_reduction <add>, %222, %cst_93 [1] : vector<16x16xf32> to vector<16xf32>
    %224 = vector.shape_cast %223 : vector<16xf32> to vector<16x1xf32>
    %225 = tpu.reciprocal %224 : vector<16x1xf32> -> vector<16x1xf32>
    %226 = vector.broadcast %225 : vector<16x1xf32> to vector<16x16xf32>
    %227 = arith.mulf %222, %226 : vector<16x16xf32>
    %228 = arith.truncf %227 : vector<16x16xf32> to vector<16x16xbf16>
    %cst_94 = arith.constant dense<0.000000e+00> : vector<16x8xf32>
    %229 = tpu.matmul %228, %215, %cst_94 {dimension_numbers = #tpu.dot_dimension_numbers<[1], [0], [0], [1], [0, 0, 1, 1], [], []>} : vector<16x16xbf16>, vector<16x8xbf16>, vector<16x8xf32> -> vector<16x8xf32>
    %230 = vector.extract_strided_slice %178 {offsets = [0, 24], sizes = [16, 8], strides = [1, 1]} : vector<16x96xbf16> to vector<16x8xbf16>
    %231 = vector.extract_strided_slice %178 {offsets = [0, 56], sizes = [16, 8], strides = [1, 1]} : vector<16x96xbf16> to vector<16x8xbf16>
    %232 = vector.extract_strided_slice %178 {offsets = [0, 88], sizes = [16, 8], strides = [1, 1]} : vector<16x96xbf16> to vector<16x8xbf16>
    %cst_95 = arith.constant dense<0.000000e+00> : vector<16x16xf32>
    %233 = tpu.matmul %230, %231, %cst_95 {dimension_numbers = #tpu.dot_dimension_numbers<[1], [1], [0], [0], [0, 0, 1, 0], [], []>} : vector<16x8xbf16>, vector<16x8xbf16>, vector<16x16xf32> -> vector<16x16xf32>
    %234 = arith.addf %233, %0 : vector<16x16xf32>
    %cst_96 = arith.constant dense<0xFF800000> : vector<16xf32>
    %235 = vector.multi_reduction <maximumf>, %234, %cst_96 [1] : vector<16x16xf32> to vector<16xf32>
    %236 = vector.shape_cast %235 : vector<16xf32> to vector<16x1xf32>
    %237 = vector.broadcast %236 : vector<16x1xf32> to vector<16x16xf32>
    %238 = arith.subf %234, %237 : vector<16x16xf32>
    %239 = math.exp %238 : vector<16x16xf32>
    %cst_97 = arith.constant dense<0.000000e+00> : vector<16xf32>
    %240 = vector.multi_reduction <add>, %239, %cst_97 [1] : vector<16x16xf32> to vector<16xf32>
    %241 = vector.shape_cast %240 : vector<16xf32> to vector<16x1xf32>
    %242 = tpu.reciprocal %241 : vector<16x1xf32> -> vector<16x1xf32>
    %243 = vector.broadcast %242 : vector<16x1xf32> to vector<16x16xf32>
    %244 = arith.mulf %239, %243 : vector<16x16xf32>
    %245 = arith.truncf %244 : vector<16x16xf32> to vector<16x16xbf16>
    %cst_98 = arith.constant dense<0.000000e+00> : vector<16x8xf32>
    %246 = tpu.matmul %245, %232, %cst_98 {dimension_numbers = #tpu.dot_dimension_numbers<[1], [0], [0], [1], [0, 0, 1, 1], [], []>} : vector<16x16xbf16>, vector<16x8xbf16>, vector<16x8xf32> -> vector<16x8xf32>
    %247 = tpu.concatenate %195, %212, %229, %246 in 1 : vector<16x8xf32>, vector<16x8xf32>, vector<16x8xf32>, vector<16x8xf32> -> vector<16x32xf32>
    %248 = arith.truncf %247 : vector<16x32xf32> to vector<16x32xbf16>
    %c1_99 = arith.constant 1 : index
    %c0_100 = arith.constant 0 : index
    %c0_101 = arith.constant 0 : index
    %249 = vector.load %arg8[%c1_99, %c0_100, %c0_101] : memref<2x32x32xbf16, #tpu.memory_space<vmem>>, vector<1x32x32xbf16>
    %250 = vector.shape_cast %249 : vector<1x32x32xbf16> to vector<32x32xbf16>
    %cst_102 = arith.constant dense<0.000000e+00> : vector<16x32xf32>
    %251 = tpu.matmul %248, %250, %cst_102 {dimension_numbers = #tpu.dot_dimension_numbers<[1], [0], [0], [1], [0, 0, 1, 1], [], []>} : vector<16x32xbf16>, vector<32x32xbf16>, vector<16x32xf32> -> vector<16x32xf32>
    %c1_103 = arith.constant 1 : index
    %c0_104 = arith.constant 0 : index
    %c0_105 = arith.constant 0 : index
    %252 = vector.load %arg9[%c1_103, %c0_104, %c0_105] : memref<2x1x32xf32, #tpu.memory_space<vmem>>, vector<1x1x32xf32>
    %253 = vector.shape_cast %252 : vector<1x1x32xf32> to vector<1x32xf32>
    %254 = vector.broadcast %253 : vector<1x32xf32> to vector<16x32xf32>
    %255 = arith.addf %251, %254 : vector<16x32xf32>
    %256 = arith.addf %169, %255 : vector<16x32xf32>
    %c1_106 = arith.constant 1 : index
    %c0_107 = arith.constant 0 : index
    %c0_108 = arith.constant 0 : index
    %257 = vector.load %arg10[%c1_106, %c0_107, %c0_108] : memref<2x1x32xf32, #tpu.memory_space<vmem>>, vector<1x1x32xf32>
    %258 = vector.shape_cast %257 : vector<1x1x32xf32> to vector<1x32xf32>
    %c1_109 = arith.constant 1 : index
    %c0_110 = arith.constant 0 : index
    %c0_111 = arith.constant 0 : index
    %259 = vector.load %arg11[%c1_109, %c0_110, %c0_111] : memref<2x1x32xf32, #tpu.memory_space<vmem>>, vector<1x1x32xf32>
    %260 = vector.shape_cast %259 : vector<1x1x32xf32> to vector<1x32xf32>
    %cst_112 = arith.constant dense<0.000000e+00> : vector<16xf32>
    %261 = vector.multi_reduction <add>, %256, %cst_112 [1] : vector<16x32xf32> to vector<16xf32>
    %262 = vector.shape_cast %261 : vector<16xf32> to vector<16x1xf32>
    %cst_113 = arith.constant 3.200000e+01 : f32
    %263 = vector.broadcast %cst_113 : f32 to vector<16x1xf32>
    %264 = arith.divf %262, %263 : vector<16x1xf32>
    %265 = vector.broadcast %264 : vector<16x1xf32> to vector<16x32xf32>
    %266 = arith.subf %256, %265 : vector<16x32xf32>
    %267 = arith.mulf %266, %266 : vector<16x32xf32>
    %cst_114 = arith.constant dense<0.000000e+00> : vector<16xf32>
    %268 = vector.multi_reduction <add>, %267, %cst_114 [1] : vector<16x32xf32> to vector<16xf32>
    %269 = vector.shape_cast %268 : vector<16xf32> to vector<16x1xf32>
    %cst_115 = arith.constant 3.200000e+01 : f32
    %270 = vector.broadcast %cst_115 : f32 to vector<16x1xf32>
    %271 = arith.divf %269, %270 : vector<16x1xf32>
    %272 = vector.broadcast %264 : vector<16x1xf32> to vector<16x32xf32>
    %273 = arith.subf %256, %272 : vector<16x32xf32>
    %cst_116 = arith.constant 9.99999974E-6 : f32
    %274 = vector.broadcast %cst_116 : f32 to vector<16x1xf32>
    %275 = arith.addf %271, %274 : vector<16x1xf32>
    %276 = math.rsqrt %275 : vector<16x1xf32>
    %277 = vector.broadcast %276 : vector<16x1xf32> to vector<16x32xf32>
    %278 = arith.mulf %273, %277 : vector<16x32xf32>
    %279 = vector.broadcast %258 : vector<1x32xf32> to vector<16x32xf32>
    %280 = arith.mulf %278, %279 : vector<16x32xf32>
    %281 = vector.broadcast %260 : vector<1x32xf32> to vector<16x32xf32>
    %282 = arith.addf %280, %281 : vector<16x32xf32>
    %283 = arith.truncf %282 : vector<16x32xf32> to vector<16x32xbf16>
    %c1_117 = arith.constant 1 : index
    %c0_118 = arith.constant 0 : index
    %c0_119 = arith.constant 0 : index
    %284 = vector.load %arg14[%c1_117, %c0_118, %c0_119] : memref<2x32x64xbf16, #tpu.memory_space<vmem>>, vector<1x32x64xbf16>
    %285 = vector.shape_cast %284 : vector<1x32x64xbf16> to vector<32x64xbf16>
    %cst_120 = arith.constant dense<0.000000e+00> : vector<16x64xf32>
    %286 = tpu.matmul %283, %285, %cst_120 {dimension_numbers = #tpu.dot_dimension_numbers<[1], [0], [0], [1], [0, 0, 1, 1], [], []>} : vector<16x32xbf16>, vector<32x64xbf16>, vector<16x64xf32> -> vector<16x64xf32>
    %c1_121 = arith.constant 1 : index
    %c0_122 = arith.constant 0 : index
    %c0_123 = arith.constant 0 : index
    %287 = vector.load %arg15[%c1_121, %c0_122, %c0_123] : memref<2x1x64xf32, #tpu.memory_space<vmem>>, vector<1x1x64xf32>
    %288 = vector.shape_cast %287 : vector<1x1x64xf32> to vector<1x64xf32>
    %289 = vector.broadcast %288 : vector<1x64xf32> to vector<16x64xf32>
    %290 = arith.addf %286, %289 : vector<16x64xf32>
    %cst_124 = arith.constant 0.000000e+00 : f32
    %291 = vector.broadcast %cst_124 : f32 to vector<16x64xf32>
    %292 = arith.maximumf %290, %291 : vector<16x64xf32>
    %293 = arith.truncf %292 : vector<16x64xf32> to vector<16x64xbf16>
    %c1_125 = arith.constant 1 : index
    %c0_126 = arith.constant 0 : index
    %c0_127 = arith.constant 0 : index
    %294 = vector.load %arg16[%c1_125, %c0_126, %c0_127] : memref<2x64x32xbf16, #tpu.memory_space<vmem>>, vector<1x64x32xbf16>
    %295 = vector.shape_cast %294 : vector<1x64x32xbf16> to vector<64x32xbf16>
    %cst_128 = arith.constant dense<0.000000e+00> : vector<16x32xf32>
    %296 = tpu.matmul %293, %295, %cst_128 {dimension_numbers = #tpu.dot_dimension_numbers<[1], [0], [0], [1], [0, 0, 1, 1], [], []>} : vector<16x64xbf16>, vector<64x32xbf16>, vector<16x32xf32> -> vector<16x32xf32>
    %c1_129 = arith.constant 1 : index
    %c0_130 = arith.constant 0 : index
    %c0_131 = arith.constant 0 : index
    %297 = vector.load %arg17[%c1_129, %c0_130, %c0_131] : memref<2x1x32xf32, #tpu.memory_space<vmem>>, vector<1x1x32xf32>
    %298 = vector.shape_cast %297 : vector<1x1x32xf32> to vector<1x32xf32>
    %299 = vector.broadcast %298 : vector<1x32xf32> to vector<16x32xf32>
    %300 = arith.addf %296, %299 : vector<16x32xf32>
    %301 = arith.addf %282, %300 : vector<16x32xf32>
    %c1_132 = arith.constant 1 : index
    %c0_133 = arith.constant 0 : index
    %c0_134 = arith.constant 0 : index
    %302 = vector.load %arg12[%c1_132, %c0_133, %c0_134] : memref<2x1x32xf32, #tpu.memory_space<vmem>>, vector<1x1x32xf32>
    %303 = vector.shape_cast %302 : vector<1x1x32xf32> to vector<1x32xf32>
    %c1_135 = arith.constant 1 : index
    %c0_136 = arith.constant 0 : index
    %c0_137 = arith.constant 0 : index
    %304 = vector.load %arg13[%c1_135, %c0_136, %c0_137] : memref<2x1x32xf32, #tpu.memory_space<vmem>>, vector<1x1x32xf32>
    %305 = vector.shape_cast %304 : vector<1x1x32xf32> to vector<1x32xf32>
    %cst_138 = arith.constant dense<0.000000e+00> : vector<16xf32>
    %306 = vector.multi_reduction <add>, %301, %cst_138 [1] : vector<16x32xf32> to vector<16xf32>
    %307 = vector.shape_cast %306 : vector<16xf32> to vector<16x1xf32>
    %cst_139 = arith.constant 3.200000e+01 : f32
    %308 = vector.broadcast %cst_139 : f32 to vector<16x1xf32>
    %309 = arith.divf %307, %308 : vector<16x1xf32>
    %310 = vector.broadcast %309 : vector<16x1xf32> to vector<16x32xf32>
    %311 = arith.subf %301, %310 : vector<16x32xf32>
    %312 = arith.mulf %311, %311 : vector<16x32xf32>
    %cst_140 = arith.constant dense<0.000000e+00> : vector<16xf32>
    %313 = vector.multi_reduction <add>, %312, %cst_140 [1] : vector<16x32xf32> to vector<16xf32>
    %314 = vector.shape_cast %313 : vector<16xf32> to vector<16x1xf32>
    %cst_141 = arith.constant 3.200000e+01 : f32
    %315 = vector.broadcast %cst_141 : f32 to vector<16x1xf32>
    %316 = arith.divf %314, %315 : vector<16x1xf32>
    %317 = vector.broadcast %309 : vector<16x1xf32> to vector<16x32xf32>
    %318 = arith.subf %301, %317 : vector<16x32xf32>
    %cst_142 = arith.constant 9.99999974E-6 : f32
    %319 = vector.broadcast %cst_142 : f32 to vector<16x1xf32>
    %320 = arith.addf %316, %319 : vector<16x1xf32>
    %321 = math.rsqrt %320 : vector<16x1xf32>
    %322 = vector.broadcast %321 : vector<16x1xf32> to vector<16x32xf32>
    %323 = arith.mulf %318, %322 : vector<16x32xf32>
    %324 = vector.broadcast %303 : vector<1x32xf32> to vector<16x32xf32>
    %325 = arith.mulf %323, %324 : vector<16x32xf32>
    %326 = vector.broadcast %305 : vector<1x32xf32> to vector<16x32xf32>
    %327 = arith.addf %325, %326 : vector<16x32xf32>
    %328 = arith.truncf %327 : vector<16x32xf32> to vector<16x32xbf16>
    %c0_143 = arith.constant 0 : index
    %c0_144 = arith.constant 0 : index
    %329 = vector.load %arg18[%c0_143, %c0_144] : memref<32x128xbf16, #tpu.memory_space<vmem>>, vector<32x128xbf16>
    %cst_145 = arith.constant dense<0.000000e+00> : vector<16x128xf32>
    %330 = tpu.matmul %328, %329, %cst_145 {dimension_numbers = #tpu.dot_dimension_numbers<[1], [0], [0], [1], [0, 0, 1, 1], [], []>} : vector<16x32xbf16>, vector<32x128xbf16>, vector<16x128xf32> -> vector<16x128xf32>
    %c0_146 = arith.constant 0 : index
    %c0_147 = arith.constant 0 : index
    %331 = vector.load %arg19[%c0_146, %c0_147] : memref<1x128xf32, #tpu.memory_space<vmem>>, vector<1x128xf32>
    %332 = vector.broadcast %331 : vector<1x128xf32> to vector<16x128xf32>
    %333 = arith.addf %330, %332 : vector<16x128xf32>
    %c0_148 = arith.constant 0 : index
    %c0_149 = arith.constant 0 : index
    %334 = vector.load %arg20[%c0_148, %c0_149] : memref<16x128xf32, #tpu.memory_space<vmem>>, vector<16x128xf32>
    tpu.vector_store %arg20[%c0_148, %c0_149], %333 {strides = array<i32>} : memref<16x128xf32, #tpu.memory_space<vmem>>, vector<16x128xf32>,
    return
  }
  func.func @transform_0(%arg0: i32) -> (i32, i32) {
    %c0_i32 = arith.constant 0 : i32
    %c0_i32_0 = arith.constant 0 : i32
    %c0_i32_1 = arith.constant 0 : i32
    return %c0_i32, %c0_i32_0 : i32, i32
  }
  func.func @transform_1(%arg0: i32) -> (i32, i32) {
    %c0_i32 = arith.constant 0 : i32
    %c0_i32_0 = arith.constant 0 : i32
    %c0_i32_1 = arith.constant 0 : i32
    return %c0_i32, %c0_i32_0 : i32, i32
  }
  func.func @transform_2(%arg0: i32) -> (i32, i32) {
    %c0_i32 = arith.constant 0 : i32
    %c0_i32_0 = arith.constant 0 : i32
    %c0_i32_1 = arith.constant 0 : i32
    return %c0_i32, %c0_i32_0 : i32, i32
  }
  func.func @transform_3(%arg0: i32) -> (i32, i32) {
    %c0_i32 = arith.constant 0 : i32
    %c0_i32_0 = arith.constant 0 : i32
    %c0_i32_1 = arith.constant 0 : i32
    return %c0_i32, %c0_i32_0 : i32, i32
  }
  func.func @transform_4(%arg0: i32) -> (i32, i32) {
    %c0_i32 = arith.constant 0 : i32
    %c0_i32_0 = arith.constant 0 : i32
    %c0_i32_1 = arith.constant 0 : i32
    return %c0_i32, %c0_i32_0 : i32, i32
  }
  func.func @transform_5(%arg0: i32) -> (i32, i32, i32) {
    %c0_i32 = arith.constant 0 : i32
    %c0_i32_0 = arith.constant 0 : i32
    %c0_i32_1 = arith.constant 0 : i32
    %c0_i32_2 = arith.constant 0 : i32
    return %c0_i32, %c0_i32_0, %c0_i32_1 : i32, i32, i32
  }
  func.func @transform_6(%arg0: i32) -> (i32, i32, i32) {
    %c0_i32 = arith.constant 0 : i32
    %c0_i32_0 = arith.constant 0 : i32
    %c0_i32_1 = arith.constant 0 : i32
    %c0_i32_2 = arith.constant 0 : i32
    return %c0_i32, %c0_i32_0, %c0_i32_1 : i32, i32, i32
  }
  func.func @transform_7(%arg0: i32) -> (i32, i32, i32) {
    %c0_i32 = arith.constant 0 : i32
    %c0_i32_0 = arith.constant 0 : i32
    %c0_i32_1 = arith.constant 0 : i32
    %c0_i32_2 = arith.constant 0 : i32
    return %c0_i32, %c0_i32_0, %c0_i32_1 : i32, i32, i32
  }
  func.func @transform_8(%arg0: i32) -> (i32, i32, i32) {
    %c0_i32 = arith.constant 0 : i32
    %c0_i32_0 = arith.constant 0 : i32
    %c0_i32_1 = arith.constant 0 : i32
    %c0_i32_2 = arith.constant 0 : i32
    return %c0_i32, %c0_i32_0, %c0_i32_1 : i32, i32, i32
  }
  func.func @transform_9(%arg0: i32) -> (i32, i32, i32) {
    %c0_i32 = arith.constant 0 : i32
    %c0_i32_0 = arith.constant 0 : i32
    %c0_i32_1 = arith.constant 0 : i32
    %c0_i32_2 = arith.constant 0 : i32
    return %c0_i32, %c0_i32_0, %c0_i32_1 : i32, i32, i32
  }
  func.func @transform_10(%arg0: i32) -> (i32, i32, i32) {
    %c0_i32 = arith.constant 0 : i32
    %c0_i32_0 = arith.constant 0 : i32
    %c0_i32_1 = arith.constant 0 : i32
    %c0_i32_2 = arith.constant 0 : i32
    return %c0_i32, %c0_i32_0, %c0_i32_1 : i32, i32, i32
  }
  func.func @transform_11(%arg0: i32) -> (i32, i32, i32) {
    %c0_i32 = arith.constant 0 : i32
    %c0_i32_0 = arith.constant 0 : i32
    %c0_i32_1 = arith.constant 0 : i32
    %c0_i32_2 = arith.constant 0 : i32
    return %c0_i32, %c0_i32_0, %c0_i32_1 : i32, i32, i32
  }
  func.func @transform_12(%arg0: i32) -> (i32, i32, i32) {
    %c0_i32 = arith.constant 0 : i32
    %c0_i32_0 = arith.constant 0 : i32
    %c0_i32_1 = arith.constant 0 : i32
    %c0_i32_2 = arith.constant 0 : i32
    return %c0_i32, %c0_i32_0, %c0_i32_1 : i32, i32, i32
  }
  func.func @transform_13(%arg0: i32) -> (i32, i32, i32) {
    %c0_i32 = arith.constant 0 : i32
    %c0_i32_0 = arith.constant 0 : i32
    %c0_i32_1 = arith.constant 0 : i32
    %c0_i32_2 = arith.constant 0 : i32
    return %c0_i32, %c0_i32_0, %c0_i32_1 : i32, i32, i32
  }
  func.func @transform_14(%arg0: i32) -> (i32, i32, i32) {
    %c0_i32 = arith.constant 0 : i32
    %c0_i32_0 = arith.constant 0 : i32
    %c0_i32_1 = arith.constant 0 : i32
    %c0_i32_2 = arith.constant 0 : i32
    return %c0_i32, %c0_i32_0, %c0_i32_1 : i32, i32, i32
  }
  func.func @transform_15(%arg0: i32) -> (i32, i32, i32) {
    %c0_i32 = arith.constant 0 : i32
    %c0_i32_0 = arith.constant 0 : i32
    %c0_i32_1 = arith.constant 0 : i32
    %c0_i32_2 = arith.constant 0 : i32
    return %c0_i32, %c0_i32_0, %c0_i32_1 : i32, i32, i32
  }
  func.func @transform_16(%arg0: i32) -> (i32, i32, i32) {
    %c0_i32 = arith.constant 0 : i32
    %c0_i32_0 = arith.constant 0 : i32
    %c0_i32_1 = arith.constant 0 : i32
    %c0_i32_2 = arith.constant 0 : i32
    return %c0_i32, %c0_i32_0, %c0_i32_1 : i32, i32, i32
  }
  func.func @transform_17(%arg0: i32) -> (i32, i32) {
    %c0_i32 = arith.constant 0 : i32
    %c0_i32_0 = arith.constant 0 : i32
    %c0_i32_1 = arith.constant 0 : i32
    return %c0_i32, %c0_i32_0 : i32, i32
  }
  func.func @transform_18(%arg0: i32) -> (i32, i32) {
    %c0_i32 = arith.constant 0 : i32
    %c0_i32_0 = arith.constant 0 : i32
    %c0_i32_1 = arith.constant 0 : i32
    return %c0_i32, %c0_i32_0 : i32, i32
  }
  func.func @transform_19(%arg0: i32) -> (i32, i32) {
    %c0_i32 = arith.constant 0 : i32
    %c0_i32_0 = arith.constant 0 : i32
    %c0_i32_1 = arith.constant 0 : i32
    return %c0_i32, %c0_i32_0 : i32, i32
  }
}

</mosaic_0001>

<llo_original>
// kernel: tpu_custom_call.1
$region0: #{tpu_custom_call.1}
  #allocation0 [shape = 'u32[]', space=smem, size = 0x4, offset = 0x4, fixed_abs, tag = 'smem constant byte address 0x4 - core index']
  #allocation1 [shape = 'u32[144,128]{1,0:T(1,128)}', space=vmem, size = 0x12000, scoped, tag = 'internal scratch']
  %s0 = inlined_call_operand.hbm [shape: f32[16,9], index: 0, kind: input, shape index: {}]
  %s1 = inlined_call_operand.hbm [shape: f32[16,16], index: 1, kind: input, shape index: {}]
  %s2 = inlined_call_operand.hbm [shape: f32[16,32], index: 2, kind: input, shape index: {}]
  %s3 = inlined_call_operand.hbm [shape: bf16[9,32], index: 3, kind: input, shape index: {}]
  %s4 = inlined_call_operand.hbm [shape: f32[1,32], index: 4, kind: input, shape index: {}]
  %s5 = inlined_call_operand.vmem [shape: bf16[2,32,96], index: 5, kind: input, shape index: {}]
  %s6 = inlined_call_operand.vmem [shape: f32[2,1,96], index: 6, kind: input, shape index: {}]
  %s7 = inlined_call_operand.vmem [shape: bf16[2,32,32], index: 7, kind: input, shape index: {}]
  %s8 = inlined_call_operand.vmem [shape: f32[2,1,32], index: 8, kind: input, shape index: {}]
  %s9 = inlined_call_operand.vmem [shape: f32[2,1,32], index: 9, kind: input, shape index: {}]
  %s10 = inlined_call_operand.vmem [shape: f32[2,1,32], index: 10, kind: input, shape index: {}]
  %s11 = inlined_call_operand.hbm [shape: f32[2,1,32], index: 11, kind: input, shape index: {}]
  %s12 = inlined_call_operand.hbm [shape: f32[2,1,32], index: 12, kind: input, shape index: {}]
  %s13 = inlined_call_operand.vmem [shape: bf16[2,32,64], index: 13, kind: input, shape index: {}]
  %s14 = inlined_call_operand.hbm [shape: f32[2,1,64], index: 14, kind: input, shape index: {}]
  %s15 = inlined_call_operand.vmem [shape: bf16[2,64,32], index: 15, kind: input, shape index: {}]
  %s16 = inlined_call_operand.vmem [shape: f32[2,1,32], index: 16, kind: input, shape index: {}]
  %s17 = inlined_call_operand.vmem [shape: bf16[32,128], index: 17, kind: input, shape index: {}]
  %s18 = inlined_call_operand.vmem [shape: f32[1,128], index: 18, kind: input, shape index: {}]
  %s19 = inlined_call_operand.hbm [shape: f32[16,128], index: 19, kind: output, shape index: {}]
  %s20 = sld [smem:[#allocation0]]
  $region118: #{tpu_custom_call.1} parent=0
    _
  %s22 = ssub.s32 1, %s20
  %s23 = scalar_select 0, %s22, %s20
  $region1: #{tpu_custom_call.1} parent=0
    #allocation2 [shape = 'u8[8192]{0}', space=vmem, size = 0x2000, scoped, tag = 'input window, operand 0, single buffered']
    #allocation3 [shape = 's32[1]{0}', space=sflag, size = 0x4, scoped, tag = 'scoped memory for tpu_custom_call.1']
    #allocation4 [shape = 's32[1]{0}', space=sflag, size = 0x4, scoped, tag = 'scoped memory for tpu_custom_call.1']
    #allocation5 [shape = 'u8[8192]{0}', space=vmem, size = 0x2000, scoped, tag = 'input window, operand 1, single buffered']
    #allocation6 [shape = 's32[1]{0}', space=sflag, size = 0x4, scoped, tag = 'scoped memory for tpu_custom_call.1']
    #allocation7 [shape = 'u8[8192]{0}', space=vmem, size = 0x2000, scoped, tag = 'input window, operand 2, single buffered']
    #allocation8 [shape = 'u8[4096]{0}', space=vmem, size = 0x1000, scoped, tag = 'input window, operand 3, single buffered']
    #allocation9 [shape = 's32[1]{0}', space=sflag, size = 0x4, scoped, tag = 'scoped memory for tpu_custom_call.1']
    #allocation10 [shape = 'u8[512]{0}', space=vmem, size = 0x400, scoped, tag = 'input window, operand 4, single buffered']
    #allocation11 [shape = 'u8[1024]{0}', space=vmem, size = 0x400, scoped, tag = 'input window, operand 11, single buffered']
    #allocation12 [shape = 's32[1]{0}', space=sflag, size = 0x4, scoped, tag = 'scoped memory for tpu_custom_call.1']
    #allocation13 [shape = 'u8[1024]{0}', space=vmem, size = 0x400, scoped, tag = 'input window, operand 12, single buffered']
    #allocation14 [shape = 'u8[1024]{0}', space=vmem, size = 0x400, scoped, tag = 'input window, operand 14, single buffered']
    #allocation15 [shape = 's32[1]{0}', space=sflag, size = 0x4, scoped, tag = 'scoped memory for tpu_custom_call.1']
    #allocation16 [shape = 'u8[8192]{0}', space=vmem, size = 0x2000, scoped, tag = 'output window, operand 0, single buffered']
    %24 = vsyncpa [#allocation3], 0
    %25 = vsyncpa [#allocation6], 0
    %26 = vsyncpa [#allocation9], 0
    %27 = vsyncpa [#allocation12], 0
    %28 = vsyncpa [#allocation15], 0
    %29 = vsyncpa [#allocation4], 0
    // Predicated region
    $region2: #{tpu_custom_call.1} parent=1 // pred_check
      _
    $region3: #{tpu_custom_call.1} parent=1 // pred_check_branch
      %31 = sbr.rel (0) target = $region5
    $region4: #{tpu_custom_call.1} parent=1 // pred_region
      %s33 = ssub.s32 256, 256
      %34 = vsyncadd [#allocation3], %s33
      %s35 = sshll.u32 [#allocation2], 4
      %s36 = int_to_ptr.vmem [resolvable:$true] %s35
      %41 = dma.hbm_to_vmem [thread:$0]  %s0, 256, %s36, [#allocation3], 128, 128, 8
    $region5: #{tpu_custom_call.1} parent=1 // pred_fallthru
      _
    // Predicated region
    $region6: #{tpu_custom_call.1} parent=1 // pred_check
      _
    $region7: #{tpu_custom_call.1} parent=1 // pred_check_branch
      %43 = sbr.rel (0) target = $region9
    $region8: #{tpu_custom_call.1} parent=1 // pred_region
      %s45 = ssub.s32 256, 256
      %46 = vsyncadd [#allocation6], %s45
      %s47 = sshll.u32 [#allocation5], 4
      %s48 = int_to_ptr.vmem [resolvable:$true] %s47
      %53 = dma.hbm_to_vmem [thread:$0]  %s1, 256, %s48, [#allocation6], 128, 128, 8
    $region9: #{tpu_custom_call.1} parent=1 // pred_fallthru
      _
    // Predicated region
    $region10: #{tpu_custom_call.1} parent=1 // pred_check
      _
    $region11: #{tpu_custom_call.1} parent=1 // pred_check_branch
      %55 = sbr.rel (0) target = $region13
    $region12: #{tpu_custom_call.1} parent=1 // pred_region
      %s57 = ssub.s32 256, 256
      %58 = vsyncadd [#allocation6], %s57
      %s59 = sshll.u32 [#allocation7], 4
      %s60 = int_to_ptr.vmem [resolvable:$true] %s59
      %65 = dma.hbm_to_vmem [thread:$0]  %s2, 256, %s60, [#allocation6], 128, 128, 8
    $region13: #{tpu_custom_call.1} parent=1 // pred_fallthru
      _
    // Predicated region
    $region14: #{tpu_custom_call.1} parent=1 // pred_check
      _
    $region15: #{tpu_custom_call.1} parent=1 // pred_check_branch
      %67 = sbr.rel (0) target = $region17
    $region16: #{tpu_custom_call.1} parent=1 // pred_region
      %s69 = ssub.s32 128, 128
      %70 = vsyncadd [#allocation9], %s69
      %s71 = sshll.u32 [#allocation8], 4
      %s72 = int_to_ptr.vmem [resolvable:$true] %s71
      %77 = dma.hbm_to_vmem [thread:$0]  %s3, 128, %s72, [#allocation9], 64, 64, 4
    $region17: #{tpu_custom_call.1} parent=1 // pred_fallthru
      _
    // Predicated region
    $region18: #{tpu_custom_call.1} parent=1 // pred_check
      _
    $region19: #{tpu_custom_call.1} parent=1 // pred_check_branch
      %79 = sbr.rel (0) target = $region21
    $region20: #{tpu_custom_call.1} parent=1 // pred_region
      %s81 = ssub.s32 16, 16
      %82 = vsyncadd [#allocation9], %s81
      %s84 = sshll.u32 [#allocation10], 4
      %s85 = int_to_ptr.vmem [resolvable:$true] %s84
      %87 = dma.hbm_to_vmem [thread:$0]  %s4, 16, %s85, [#allocation9]
    $region21: #{tpu_custom_call.1} parent=1 // pred_fallthru
      _
    // Predicated region
    $region22: #{tpu_custom_call.1} parent=1 // pred_check
      _
    $region23: #{tpu_custom_call.1} parent=1 // pred_check_branch
      %89 = sbr.rel (0) target = $region25
    $region24: #{tpu_custom_call.1} parent=1 // pred_region
      _
    $region25: #{tpu_custom_call.1} parent=1 // pred_fallthru
      _
    // Predicated region
    $region26: #{tpu_custom_call.1} parent=1 // pred_check
      _
    $region27: #{tpu_custom_call.1} parent=1 // pred_check_branch
      %91 = sbr.rel (0) target = $region29
    $region28: #{tpu_custom_call.1} parent=1 // pred_region
      _
    $region29: #{tpu_custom_call.1} parent=1 // pred_fallthru
      _
    // Predicated region
    $region30: #{tpu_custom_call.1} parent=1 // pred_check
      _
    $region31: #{tpu_custom_call.1} parent=1 // pred_check_branch
      %93 = sbr.rel (0) target = $region33
    $region32: #{tpu_custom_call.1} parent=1 // pred_region
      _
    $region33: #{tpu_custom_call.1} parent=1 // pred_fallthru
      _
    // Predicated region
    $region34: #{tpu_custom_call.1} parent=1 // pred_check
      _
    $region35: #{tpu_custom_call.1} parent=1 // pred_check_branch
      %95 = sbr.rel (0) target = $region37
    $region36: #{tpu_custom_call.1} parent=1 // pred_region
      _
    $region37: #{tpu_custom_call.1} parent=1 // pred_fallthru
      _
    // Predicated region
    $region38: #{tpu_custom_call.1} parent=1 // pred_check
      _
    $region39: #{tpu_custom_call.1} parent=1 // pred_check_branch
      %97 = sbr.rel (0) target = $region41
    $region40: #{tpu_custom_call.1} parent=1 // pred_region
      _
    $region41: #{tpu_custom_call.1} parent=1 // pred_fallthru
      _
    // Predicated region
    $region42: #{tpu_custom_call.1} parent=1 // pred_check
      _
    $region43: #{tpu_custom_call.1} parent=1 // pred_check_branch
      %99 = sbr.rel (0) target = $region45
    $region44: #{tpu_custom_call.1} parent=1 // pred_region
      _
    $region45: #{tpu_custom_call.1} parent=1 // pred_fallthru
      _
    // Predicated region
    $region46: #{tpu_custom_call.1} parent=1 // pred_check
      _
    $region47: #{tpu_custom_call.1} parent=1 // pred_check_branch
      %101 = sbr.rel (0) target = $region49
    $region48: #{tpu_custom_call.1} parent=1 // pred_region
      %s103 = ssub.s32 32, 32
      %104 = vsyncadd [#allocation12], %s103
      %s105 = sshll.u32 [#allocation11], 4
      %s106 = int_to_ptr.vmem [resolvable:$true] %s105
      %111 = dma.hbm_to_vmem [thread:$0]  %s11, 32, %s106, [#allocation12], 16, 16, 1
    $region49: #{tpu_custom_call.1} parent=1 // pred_fallthru
      _
    // Predicated region
    $region50: #{tpu_custom_call.1} parent=1 // pred_check
      _
    $region51: #{tpu_custom_call.1} parent=1 // pred_check_branch
      %113 = sbr.rel (0) target = $region53
    $region52: #{tpu_custom_call.1} parent=1 // pred_region
      %s115 = ssub.s32 32, 32
      %116 = vsyncadd [#allocation12], %s115
      %s117 = sshll.u32 [#allocation13], 4
      %s118 = int_to_ptr.vmem [resolvable:$true] %s117
      %123 = dma.hbm_to_vmem [thread:$0]  %s12, 32, %s118, [#allocation12], 16, 16, 1
    $region53: #{tpu_custom_call.1} parent=1 // pred_fallthru
      _
    // Predicated region
    $region54: #{tpu_custom_call.1} parent=1 // pred_check
      _
    $region55: #{tpu_custom_call.1} parent=1 // pred_check_branch
      %125 = sbr.rel (0) target = $region57
    $region56: #{tpu_custom_call.1} parent=1 // pred_region
      _
    $region57: #{tpu_custom_call.1} parent=1 // pred_fallthru
      _
    // Predicated region
    $region58: #{tpu_custom_call.1} parent=1 // pred_check
      _
    $region59: #{tpu_custom_call.1} parent=1 // pred_check_branch
      %127 = sbr.rel (0) target = $region61
    $region60: #{tpu_custom_call.1} parent=1 // pred_region
      %s129 = ssub.s32 32, 32
      %130 = vsyncadd [#allocation15], %s129
      %s131 = sshll.u32 [#allocation14], 4
      %s132 = int_to_ptr.vmem [resolvable:$true] %s131
      %137 = dma.hbm_to_vmem [thread:$0]  %s14, 32, %s132, [#allocation15], 16, 16, 1
    $region61: #{tpu_custom_call.1} parent=1 // pred_fallthru
      _
    // Predicated region
    $region62: #{tpu_custom_call.1} parent=1 // pred_check
      _
    $region63: #{tpu_custom_call.1} parent=1 // pred_check_branch
      %139 = sbr.rel (0) target = $region65
    $region64: #{tpu_custom_call.1} parent=1 // pred_region
      _
    $region65: #{tpu_custom_call.1} parent=1 // pred_fallthru
      _
    // Predicated region
    $region66: #{tpu_custom_call.1} parent=1 // pred_check
      _
    $region67: #{tpu_custom_call.1} parent=1 // pred_check_branch
      %141 = sbr.rel (0) target = $region69
    $region68: #{tpu_custom_call.1} parent=1 // pred_region
      _
    $region69: #{tpu_custom_call.1} parent=1 // pred_fallthru
      _
    // Predicated region
    $region70: #{tpu_custom_call.1} parent=1 // pred_check
      _
    $region71: #{tpu_custom_call.1} parent=1 // pred_check_branch
      %143 = sbr.rel (0) target = $region73
    $region72: #{tpu_custom_call.1} parent=1 // pred_region
      _
    $region73: #{tpu_custom_call.1} parent=1 // pred_fallthru
      _
    // Predicated region
    $region74: #{tpu_custom_call.1} parent=1 // pred_check
      _
    $region75: #{tpu_custom_call.1} parent=1 // pred_check_branch
      %145 = sbr.rel (0) target = $region77
    $region76: #{tpu_custom_call.1} parent=1 // pred_region
      _
    $region77: #{tpu_custom_call.1} parent=1 // pred_fallthru
      _
    // Predicated region
    $region78: #{tpu_custom_call.1} parent=1 // pred_check
      _
    $region79: #{tpu_custom_call.1} parent=1 // pred_check_branch
      %147 = sbr.rel (0) target = $region81
    $region80: #{tpu_custom_call.1} parent=1 // pred_region
      %148 = dma.done [#allocation3], 256
    $region81: #{tpu_custom_call.1} parent=1 // pred_fallthru
      _
    // Predicated region
    $region82: #{tpu_custom_call.1} parent=1 // pred_check
      _
    $region83: #{tpu_custom_call.1} parent=1 // pred_check_branch
      %150 = sbr.rel (0) target = $region85
    $region84: #{tpu_custom_call.1} parent=1 // pred_region
      %151 = dma.done [#allocation6], 256
    $region85: #{tpu_custom_call.1} parent=1 // pred_fallthru
      _
    // Predicated region
    $region86: #{tpu_custom_call.1} parent=1 // pred_check
      _
    $region87: #{tpu_custom_call.1} parent=1 // pred_check_branch
      %153 = sbr.rel (0) target = $region89
    $region88: #{tpu_custom_call.1} parent=1 // pred_region
      %154 = dma.done [#allocation6], 256
    $region89: #{tpu_custom_call.1} parent=1 // pred_fallthru
      _
    // Predicated region
    $region90: #{tpu_custom_call.1} parent=1 // pred_check
      _
    $region91: #{tpu_custom_call.1} parent=1 // pred_check_branch
      %156 = sbr.rel (0) target = $region93
    $region92: #{tpu_custom_call.1} parent=1 // pred_region
      %157 = dma.done [#allocation9], 128
    $region93: #{tpu_custom_call.1} parent=1 // pred_fallthru
      _
    // Predicated region
    $region94: #{tpu_custom_call.1} parent=1 // pred_check
      _
    $region95: #{tpu_custom_call.1} parent=1 // pred_check_branch
      %159 = sbr.rel (0) target = $region97
    $region96: #{tpu_custom_call.1} parent=1 // pred_region
      %160 = dma.done [#allocation9], 16
    $region97: #{tpu_custom_call.1} parent=1 // pred_fallthru
      _
    // Predicated region
    $region98: #{tpu_custom_call.1} parent=1 // pred_check
      _
    $region99: #{tpu_custom_call.1} parent=1 // pred_check_branch
      %162 = sbr.rel (0) target = $region101
    $region100: #{tpu_custom_call.1} parent=1 // pred_region
      %163 = dma.done [#allocation12], 32
    $region101: #{tpu_custom_call.1} parent=1 // pred_fallthru
      _
    // Predicated region
    $region102: #{tpu_custom_call.1} parent=1 // pred_check
      _
    $region103: #{tpu_custom_call.1} parent=1 // pred_check_branch
      %165 = sbr.rel (0) target = $region105
    $region104: #{tpu_custom_call.1} parent=1 // pred_region
      %166 = dma.done [#allocation12], 32
    $region105: #{tpu_custom_call.1} parent=1 // pred_fallthru
      _
    // Predicated region
    $region106: #{tpu_custom_call.1} parent=1 // pred_check
      _
    $region107: #{tpu_custom_call.1} parent=1 // pred_check_branch
      %168 = sbr.rel (0) target = $region109
    $region108: #{tpu_custom_call.1} parent=1 // pred_region
      %169 = dma.done [#allocation15], 32
    $region109: #{tpu_custom_call.1} parent=1 // pred_fallthru
      _
    %v171 = vld [vmem:[#allocation5] sm:$0xff]
    %v172 = vld [vmem:[#allocation5 + $0x8] sm:$0xff]
    %v173 = vld [vmem:[#allocation2] sm:$0xff]
    %v174 = vld [vmem:[#allocation2 + $0x8] sm:$0xff]
    %v175 = vpack.c.bf16 %v174, %v173
    %v176 = vld [vmem:[#allocation8] sm:$0xf]
    %v177 = vld [vmem:[#allocation8 + $0x4] sm:$0x1]
    %v178 = vld [vmem:[#allocation10] sm:$0x1]
    %v180 = vlaneseq
    %v181 = vshrl.u32 %v180, 7
    %v182 = vsub.s32 0, %v181
    %v183 = vrot.slane %v178, %v182
    %v187 = vunpack.c.l.b16 %v176
    %v188 = vunpack.c.l.b16 %v177
    %v189 = vpack.c.b16 %v188, %v187
    %vm190 = vcmask 72704
    %v192 = vsel %vm190, %v175, 0
    %vm194 = vcmask 1043456
    %vm195 = vcmask 1044480
    %v196 = vsel %vm194, 4294967295, 65535
    %v197 = vsel %vm195, %v196, 0
    %v199 = vand.u32 %v189, %v197
    %201 = vmatprep.subr.bf16.mxu0 0
    %202 = vmatpush1.bf16.msra.mxu0 %v199
    %203 = vmatprep.subr.bf16.mxu0 0
    %204 = vmatpush1.bf16.msra.mxu0 0
    %205 = vmatprep.subr.bf16.mxu0 0
    %206 = vmatpush1.bf16.msra.mxu0 0
    %207 = vmatprep.subr.bf16.mxu0 0
    %208 = vmatpush1.bf16.msra.mxu0 0
    %209 = vmatprep.subr.bf16.mxu0 0
    %210 = vmatpush1.bf16.msra.mxu0 0
    %211 = vmatprep.subr.bf16.mxu0 0
    %212 = vmatpush1.bf16.msra.mxu0 0
    %213 = vmatprep.subr.bf16.mxu0 0
    %214 = vmatpush1.bf16.msra.mxu0 0
    %215 = vmatprep.subr.bf16.mxu0 0
    %216 = vmatpush1.bf16.msra.mxu0 0
    %217 = vmatprep.subr.bf16.mxu0 0
    %218 = vmatpush1.bf16.msra.mxu0 0
    %219 = vmatprep.subr.bf16.mxu0 0
    %220 = vmatpush1.bf16.msra.mxu0 0
    %221 = vmatprep.subr.bf16.mxu0 0
    %222 = vmatpush1.bf16.msra.mxu0 0
    %223 = vmatprep.subr.bf16.mxu0 0
    %224 = vmatpush1.bf16.msra.mxu0 0
    %225 = vmatprep.subr.bf16.mxu0 0
    %226 = vmatpush1.bf16.msra.mxu0 0
    %227 = vmatprep.subr.bf16.mxu0 0
    %228 = vmatpush1.bf16.msra.mxu0 0
    %229 = vmatprep.subr.bf16.mxu0 0
    %230 = vmatpush1.bf16.msra.mxu0 0
    %231 = vmatprep.subr.bf16.mxu0 0
    %232 = vmatpush1.bf16.msra.mxu0 0
    %233 = vmatprep.mubr.bf16.mxu0 0
    %234 = vmatmul.mubr.bf16.gmra.mrb[0].mxu0 %v192
    %v235 = vpop.f32.mrb[0].mxu0
    %v236 = vadd.f32 %v183, %v235
    %v237 = vpop.f32.mrb[0].mxu0
    %v238 = vpop.f32.mrb[0].mxu0
    %v239 = vadd.f32 %v183, %v238
    %v240 = vpop.f32.mrb[0].mxu0
    %241 = vdwg.mxu0
    %v242 = vmax.f32 %v236, 0.0
    %v243 = vmax.f32 %v239, 0.0
    %v244 = vld [vmem:[#allocation7] sm:$0xff]
    %v245 = vld [vmem:[#allocation7 + $0x8] sm:$0xff]
    %v246 = vadd.f32 %v242, %v244
    %v247 = vadd.f32 %v243, %v245
    %v248 = vpack.c.bf16 %v247, %v246
    %v249 = vld [vmem:[%s5] sm:$0xf]
    %v250 = vld [vmem:[%s5 + $0x4] sm:$0xf]
    %v251 = vld [vmem:[%s5 + $0x8] sm:$0xf]
    %v252 = vld [vmem:[%s5 + $0xc] sm:$0xf]
    %v253 = vld [vmem:[%s6] sm:$0x1]
    %v255 = vlaneseq
    %v256 = vshrl.u32 %v255, 7
    %v257 = vsub.s32 0, %v256
    %v258 = vrot.slane %v253, %v257
    %v264 = vunpack.c.l.b16 %v249
    %v265 = vunpack.c.l.b16 %v250
    %v266 = vunpack.c.l.b16 %v251
    %v267 = vunpack.c.l.b16 %v252
    %v268 = vpack.c.b16 %v265, %v264
    %v269 = vpack.c.b16 %v267, %v266
    %vm272 = vcmask 261120
    %v274 = vsel %vm272, %v248, 0
    %276 = vmatprep.subr.bf16.mxu0 0
    %277 = vmatpush1.bf16.msra.mxu0 %v268
    %278 = vmatprep.subr.bf16.mxu0 0
    %279 = vmatpush1.bf16.msra.mxu0 %v269
    %280 = vmatprep.subr.bf16.mxu0 0
    %281 = vmatpush1.bf16.msra.mxu0 0
    %282 = vmatprep.subr.bf16.mxu0 0
    %283 = vmatpush1.bf16.msra.mxu0 0
    %284 = vmatprep.subr.bf16.mxu0 0
    %285 = vmatpush1.bf16.msra.mxu0 0
    %286 = vmatprep.subr.bf16.mxu0 0
    %287 = vmatpush1.bf16.msra.mxu0 0
    %288 = vmatprep.subr.bf16.mxu0 0
    %289 = vmatpush1.bf16.msra.mxu0 0
    %290 = vmatprep.subr.bf16.mxu0 0
    %291 = vmatpush1.bf16.msra.mxu0 0
    %292 = vmatprep.subr.bf16.mxu0 0
    %293 = vmatpush1.bf16.msra.mxu0 0
    %294 = vmatprep.subr.bf16.mxu0 0
    %295 = vmatpush1.bf16.msra.mxu0 0
    %296 = vmatprep.subr.bf16.mxu0 0
    %297 = vmatpush1.bf16.msra.mxu0 0
    %298 = vmatprep.subr.bf16.mxu0 0
    %299 = vmatpush1.bf16.msra.mxu0 0
    %300 = vmatprep.subr.bf16.mxu0 0
    %301 = vmatpush1.bf16.msra.mxu0 0
    %302 = vmatprep.subr.bf16.mxu0 0
    %303 = vmatpush1.bf16.msra.mxu0 0
    %304 = vmatprep.subr.bf16.mxu0 0
    %305 = vmatpush1.bf16.msra.mxu0 0
    %306 = vmatprep.subr.bf16.mxu0 0
    %307 = vmatpush1.bf16.msra.mxu0 0
    %308 = vmatprep.mubr.bf16.mxu0 0
    %309 = vmatmul.mubr.bf16.gmra.mrb[0].mxu0 %v274
    %v310 = vpop.f32.mrb[0].mxu0
    %v311 = vadd.f32 %v258, %v310
    %v312 = vpop.f32.mrb[0].mxu0
    %v313 = vpop.f32.mrb[0].mxu0
    %v314 = vadd.f32 %v258, %v313
    %v315 = vpop.f32.mrb[0].mxu0
    %316 = vdwg.mxu0
    %v317 = vpack.c.bf16 %v314, %v311
    %319 = vrot.lane.b32.xlu0 %v317, 96
    %v320 = vpop.permute.xlu0 %319
    %vm321 = vcmask 64512
    %v323 = vsel %vm321, %v317, 0
    %v326 = vsel %vm321, %v320, 0
    %328 = vmatprep.subr.bf16.mxu0 0
    %329 = vmatpush1.bf16.xpose.msra.mxu0 %v326
    %330 = vmatprep.subr.bf16.mxu0 0
    %331 = vmatpush1.bf16.xpose.msra.mxu0 0
    %332 = vmatprep.subr.bf16.mxu0 0
    %333 = vmatpush1.bf16.xpose.msra.mxu0 0
    %334 = vmatprep.subr.bf16.mxu0 0
    %335 = vmatpush1.bf16.xpose.msra.mxu0 0
    %336 = vmatprep.subr.bf16.mxu0 0
    %337 = vmatpush1.bf16.xpose.msra.mxu0 0
    %338 = vmatprep.subr.bf16.mxu0 0
    %339 = vmatpush1.bf16.xpose.msra.mxu0 0
    %340 = vmatprep.subr.bf16.mxu0 0
    %341 = vmatpush1.bf16.xpose.msra.mxu0 0
    %342 = vmatprep.subr.bf16.mxu0 0
    %343 = vmatpush1.bf16.xpose.msra.mxu0 0
    %344 = vmatprep.subr.bf16.mxu0 0
    %345 = vmatpush1.bf16.xpose.msra.mxu0 0
    %346 = vmatprep.subr.bf16.mxu0 0
    %347 = vmatpush1.bf16.xpose.msra.mxu0 0
    %348 = vmatprep.subr.bf16.mxu0 0
    %349 = vmatpush1.bf16.xpose.msra.mxu0 0
    %350 = vmatprep.subr.bf16.mxu0 0
    %351 = vmatpush1.bf16.xpose.msra.mxu0 0
    %352 = vmatprep.subr.bf16.mxu0 0
    %353 = vmatpush1.bf16.xpose.msra.mxu0 0
    %354 = vmatprep.subr.bf16.mxu0 0
    %355 = vmatpush1.bf16.xpose.msra.mxu0 0
    %356 = vmatprep.subr.bf16.mxu0 0
    %357 = vmatpush1.bf16.xpose.msra.mxu0 0
    %358 = vmatprep.subr.bf16.mxu0 0
    %359 = vmatpush1.bf16.xpose.msra.mxu0 0
    %360 = vmatprep.mubr.bf16.mxu0 0
    %361 = vmatmul.mubr.bf16.gmra.mrb[0].mxu0 %v323
    %v362 = vpop.f32.mrb[0].mxu0
    %v363 = vadd.f32 %v171, %v362
    %v364 = vpop.f32.mrb[0].mxu0
    %v365 = vpop.f32.mrb[0].mxu0
    %v366 = vadd.f32 %v172, %v365
    %v367 = vpop.f32.mrb[0].mxu0
    %368 = vdwg.mxu0
    %vm369 = vcmask 130048
    %v370 = vsel %vm369, %v363, -inf
    %371 = vmax.xlane.f32.xlu0 %v370
    %v372 = vpop.xlane.xlu0 %371
    %v373 = vsel %vm369, %v366, -inf
    %374 = vmax.xlane.f32.xlu0 %v373
    %v375 = vpop.xlane.xlu0 %374
    %v376 = vsub.f32 %v363, %v372
    %v377 = vsub.f32 %v366, %v375
    %v378 = vmul.f32 %v376, 1.442695
    %v379 = vpow.pop %v378
    %v380 = vmul.f32 %v377, 1.442695
    %v381 = vpow.pop %v380
    %v382 = vsel %vm369, %v379, 0.0
    %383 = vadd.xlane.f32.xlu0 %v382
    %v384 = vpop.xlane.xlu0 %383
    %v385 = vsel %vm369, %v381, 0.0
    %386 = vadd.xlane.f32.xlu0 %v385
    %v387 = vpop.xlane.xlu0 %386
    %v388 = vrcp.pop %v384
    %v389 = vrcp.pop %v387
    %v390 = vmul.f32 %v379, %v388
    %v391 = vmul.f32 %v381, %v389
    %v392 = vpack.c.bf16 %v391, %v390
    %393 = vrot.lane.b32.xlu0 %v317, 64
    %v394 = vpop.permute.xlu0 %393
    %v397 = vsel %vm369, %v392, 0
    %399 = vmatprep.subr.bf16.mxu0 0
    %400 = vmatpush1.bf16.msra.mxu0 %v394
    %401 = vmatprep.subr.bf16.mxu0 0
    %402 = vmatpush1.bf16.msra.mxu0 0
    %403 = vmatprep.subr.bf16.mxu0 0
    %404 = vmatpush1.bf16.msra.mxu0 0
    %405 = vmatprep.subr.bf16.mxu0 0
    %406 = vmatpush1.bf16.msra.mxu0 0
    %407 = vmatprep.subr.bf16.mxu0 0
    %408 = vmatpush1.bf16.msra.mxu0 0
    %409 = vmatprep.subr.bf16.mxu0 0
    %410 = vmatpush1.bf16.msra.mxu0 0
    %411 = vmatprep.subr.bf16.mxu0 0
    %412 = vmatpush1.bf16.msra.mxu0 0
    %413 = vmatprep.subr.bf16.mxu0 0
    %414 = vmatpush1.bf16.msra.mxu0 0
    %415 = vmatprep.subr.bf16.mxu0 0
    %416 = vmatpush1.bf16.msra.mxu0 0
    %417 = vmatprep.subr.bf16.mxu0 0
    %418 = vmatpush1.bf16.msra.mxu0 0
    %419 = vmatprep.subr.bf16.mxu0 0
    %420 = vmatpush1.bf16.msra.mxu0 0
    %421 = vmatprep.subr.bf16.mxu0 0
    %422 = vmatpush1.bf16.msra.mxu0 0
    %423 = vmatprep.subr.bf16.mxu0 0
    %424 = vmatpush1.bf16.msra.mxu0 0
    %425 = vmatprep.subr.bf16.mxu0 0
    %426 = vmatpush1.bf16.msra.mxu0 0
    %427 = vmatprep.subr.bf16.mxu0 0
    %428 = vmatpush1.bf16.msra.mxu0 0
    %429 = vmatprep.subr.bf16.mxu0 0
    %430 = vmatpush1.bf16.msra.mxu0 0
    %431 = vmatprep.mubr.bf16.mxu0 0
    %432 = vmatmul.mubr.bf16.gmra.mrb[0].mxu0 %v397
    %v433 = vpop.f32.mrb[0].mxu0
    %v434 = vadd.f32 0.0, %v433
    %v435 = vpop.f32.mrb[0].mxu0
    %v436 = vpop.f32.mrb[0].mxu0
    %v437 = vadd.f32 0.0, %v436
    %v438 = vpop.f32.mrb[0].mxu0
    %439 = vdwg.mxu0
    %440 = vrot.lane.b32.xlu0 %v317, 120
    %v441 = vpop.permute.xlu0 %440
    %442 = vrot.lane.b32.xlu0 %v317, 88
    %v443 = vpop.permute.xlu0 %442
    %v445 = vsel %vm321, %v441, 0
    %v448 = vsel %vm321, %v443, 0
    %450 = vmatprep.subr.bf16.mxu0 0
    %451 = vmatpush1.bf16.xpose.msra.mxu0 %v448
    %452 = vmatprep.subr.bf16.mxu0 0
    %453 = vmatpush1.bf16.xpose.msra.mxu0 0
    %454 = vmatprep.subr.bf16.mxu0 0
    %455 = vmatpush1.bf16.xpose.msra.mxu0 0
    %456 = vmatprep.subr.bf16.mxu0 0
    %457 = vmatpush1.bf16.xpose.msra.mxu0 0
    %458 = vmatprep.subr.bf16.mxu0 0
    %459 = vmatpush1.bf16.xpose.msra.mxu0 0
    %460 = vmatprep.subr.bf16.mxu0 0
    %461 = vmatpush1.bf16.xpose.msra.mxu0 0
    %462 = vmatprep.subr.bf16.mxu0 0
    %463 = vmatpush1.bf16.xpose.msra.mxu0 0
    %464 = vmatprep.subr.bf16.mxu0 0
    %465 = vmatpush1.bf16.xpose.msra.mxu0 0
    %466 = vmatprep.subr.bf16.mxu0 0
    %467 = vmatpush1.bf16.xpose.msra.mxu0 0
    %468 = vmatprep.subr.bf16.mxu0 0
    %469 = vmatpush1.bf16.xpose.msra.mxu0 0
    %470 = vmatprep.subr.bf16.mxu0 0
    %471 = vmatpush1.bf16.xpose.msra.mxu0 0
    %472 = vmatprep.subr.bf16.mxu0 0
    %473 = vmatpush1.bf16.xpose.msra.mxu0 0
    %474 = vmatprep.subr.bf16.mxu0 0
    %475 = vmatpush1.bf16.xpose.msra.mxu0 0
    %476 = vmatprep.subr.bf16.mxu0 0
    %477 = vmatpush1.bf16.xpose.msra.mxu0 0
    %478 = vmatprep.subr.bf16.mxu0 0
    %479 = vmatpush1.bf16.xpose.msra.mxu0 0
    %480 = vmatprep.subr.bf16.mxu0 0
    %481 = vmatpush1.bf16.xpose.msra.mxu0 0
    %482 = vmatprep.mubr.bf16.mxu0 0
    %483 = vmatmul.mubr.bf16.gmra.mrb[0].mxu0 %v445
    %v484 = vpop.f32.mrb[0].mxu0
    %v485 = vadd.f32 %v171, %v484
    %v486 = vpop.f32.mrb[0].mxu0
    %v487 = vpop.f32.mrb[0].mxu0
    %v488 = vadd.f32 %v172, %v487
    %v489 = vpop.f32.mrb[0].mxu0
    %490 = vdwg.mxu0
    %v491 = vsel %vm369, %v485, -inf
    %492 = vmax.xlane.f32.xlu0 %v491
    %v493 = vpop.xlane.xlu0 %492
    %v494 = vsel %vm369, %v488, -inf
    %495 = vmax.xlane.f32.xlu0 %v494
    %v496 = vpop.xlane.xlu0 %495
    %v497 = vsub.f32 %v485, %v493
    %v498 = vsub.f32 %v488, %v496
    %v499 = vmul.f32 %v497, 1.442695
    %v500 = vpow.pop %v499
    %v501 = vmul.f32 %v498, 1.442695
    %v502 = vpow.pop %v501
    %v503 = vsel %vm369, %v500, 0.0
    %504 = vadd.xlane.f32.xlu0 %v503
    %v505 = vpop.xlane.xlu0 %504
    %v506 = vsel %vm369, %v502, 0.0
    %507 = vadd.xlane.f32.xlu0 %v506
    %v508 = vpop.xlane.xlu0 %507
    %v509 = vrcp.pop %v505
    %v510 = vrcp.pop %v508
    %v511 = vmul.f32 %v500, %v509
    %v512 = vmul.f32 %v502, %v510
    %v513 = vpack.c.bf16 %v512, %v511
    %514 = vrot.lane.b32.xlu0 %v317, 56
    %v515 = vpop.permute.xlu0 %514
    %v518 = vsel %vm369, %v513, 0
    %520 = vmatprep.subr.bf16.mxu0 0
    %521 = vmatpush1.bf16.msra.mxu0 %v515
    %522 = vmatprep.subr.bf16.mxu0 0
    %523 = vmatpush1.bf16.msra.mxu0 0
    %524 = vmatprep.subr.bf16.mxu0 0
    %525 = vmatpush1.bf16.msra.mxu0 0
    %526 = vmatprep.subr.bf16.mxu0 0
    %527 = vmatpush1.bf16.msra.mxu0 0
    %528 = vmatprep.subr.bf16.mxu0 0
    %529 = vmatpush1.bf16.msra.mxu0 0
    %530 = vmatprep.subr.bf16.mxu0 0
    %531 = vmatpush1.bf16.msra.mxu0 0
    %532 = vmatprep.subr.bf16.mxu0 0
    %533 = vmatpush1.bf16.msra.mxu0 0
    %534 = vmatprep.subr.bf16.mxu0 0
    %535 = vmatpush1.bf16.msra.mxu0 0
    %536 = vmatprep.subr.bf16.mxu0 0
    %537 = vmatpush1.bf16.msra.mxu0 0
    %538 = vmatprep.subr.bf16.mxu0 0
    %539 = vmatpush1.bf16.msra.mxu0 0
    %540 = vmatprep.subr.bf16.mxu0 0
    %541 = vmatpush1.bf16.msra.mxu0 0
    %542 = vmatprep.subr.bf16.mxu0 0
    %543 = vmatpush1.bf16.msra.mxu0 0
    %544 = vmatprep.subr.bf16.mxu0 0
    %545 = vmatpush1.bf16.msra.mxu0 0
    %546 = vmatprep.subr.bf16.mxu0 0
    %547 = vmatpush1.bf16.msra.mxu0 0
    %548 = vmatprep.subr.bf16.mxu0 0
    %549 = vmatpush1.bf16.msra.mxu0 0
    %550 = vmatprep.subr.bf16.mxu0 0
    %551 = vmatpush1.bf16.msra.mxu0 0
    %552 = vmatprep.mubr.bf16.mxu0 0
    %553 = vmatmul.mubr.bf16.gmra.mrb[0].mxu0 %v518
    %v554 = vpop.f32.mrb[0].mxu0
    %v555 = vadd.f32 0.0, %v554
    %v556 = vpop.f32.mrb[0].mxu0
    %v557 = vpop.f32.mrb[0].mxu0
    %v558 = vadd.f32 0.0, %v557
    %v559 = vpop.f32.mrb[0].mxu0
    %560 = vdwg.mxu0
    %561 = vrot.lane.b32.xlu0 %v317, 112
    %v562 = vpop.permute.xlu0 %561
    %563 = vrot.lane.b32.xlu0 %v317, 80
    %v564 = vpop.permute.xlu0 %563
    %v566 = vsel %vm321, %v562, 0
    %v569 = vsel %vm321, %v564, 0
    %571 = vmatprep.subr.bf16.mxu0 0
    %572 = vmatpush1.bf16.xpose.msra.mxu0 %v569
    %573 = vmatprep.subr.bf16.mxu0 0
    %574 = vmatpush1.bf16.xpose.msra.mxu0 0
    %575 = vmatprep.subr.bf16.mxu0 0
    %576 = vmatpush1.bf16.xpose.msra.mxu0 0
    %577 = vmatprep.subr.bf16.mxu0 0
    %578 = vmatpush1.bf16.xpose.msra.mxu0 0
    %579 = vmatprep.subr.bf16.mxu0 0
    %580 = vmatpush1.bf16.xpose.msra.mxu0 0
    %581 = vmatprep.subr.bf16.mxu0 0
    %582 = vmatpush1.bf16.xpose.msra.mxu0 0
    %583 = vmatprep.subr.bf16.mxu0 0
    %584 = vmatpush1.bf16.xpose.msra.mxu0 0
    %585 = vmatprep.subr.bf16.mxu0 0
    %586 = vmatpush1.bf16.xpose.msra.mxu0 0
    %587 = vmatprep.subr.bf16.mxu0 0
    %588 = vmatpush1.bf16.xpose.msra.mxu0 0
    %589 = vmatprep.subr.bf16.mxu0 0
    %590 = vmatpush1.bf16.xpose.msra.mxu0 0
    %591 = vmatprep.subr.bf16.mxu0 0
    %592 = vmatpush1.bf16.xpose.msra.mxu0 0
    %593 = vmatprep.subr.bf16.mxu0 0
    %594 = vmatpush1.bf16.xpose.msra.mxu0 0
    %595 = vmatprep.subr.bf16.mxu0 0
    %596 = vmatpush1.bf16.xpose.msra.mxu0 0
    %597 = vmatprep.subr.bf16.mxu0 0
    %598 = vmatpush1.bf16.xpose.msra.mxu0 0
    %599 = vmatprep.subr.bf16.mxu0 0
    %600 = vmatpush1.bf16.xpose.msra.mxu0 0
    %601 = vmatprep.subr.bf16.mxu0 0
    %602 = vmatpush1.bf16.xpose.msra.mxu0 0
    %603 = vmatprep.mubr.bf16.mxu0 0
    %604 = vmatmul.mubr.bf16.gmra.mrb[0].mxu0 %v566
    %v605 = vpop.f32.mrb[0].mxu0
    %v606 = vadd.f32 %v171, %v605
    %v607 = vpop.f32.mrb[0].mxu0
    %v608 = vpop.f32.mrb[0].mxu0
    %v609 = vadd.f32 %v172, %v608
    %v610 = vpop.f32.mrb[0].mxu0
    %611 = vdwg.mxu0
    %v612 = vsel %vm369, %v606, -inf
    %613 = vmax.xlane.f32.xlu0 %v612
    %v614 = vpop.xlane.xlu0 %613
    %v615 = vsel %vm369, %v609, -inf
    %616 = vmax.xlane.f32.xlu0 %v615
    %v617 = vpop.xlane.xlu0 %616
    %v618 = vsub.f32 %v606, %v614
    %v619 = vsub.f32 %v609, %v617
    %v620 = vmul.f32 %v618, 1.442695
    %v621 = vpow.pop %v620
    %v622 = vmul.f32 %v619, 1.442695
    %v623 = vpow.pop %v622
    %v624 = vsel %vm369, %v621, 0.0
    %625 = vadd.xlane.f32.xlu0 %v624
    %v626 = vpop.xlane.xlu0 %625
    %v627 = vsel %vm369, %v623, 0.0
    %628 = vadd.xlane.f32.xlu0 %v627
    %v629 = vpop.xlane.xlu0 %628
    %v630 = vrcp.pop %v626
    %v631 = vrcp.pop %v629
    %v632 = vmul.f32 %v621, %v630
    %v633 = vmul.f32 %v623, %v631
    %v634 = vpack.c.bf16 %v633, %v632
    %635 = vrot.lane.b32.xlu0 %v317, 48
    %v636 = vpop.permute.xlu0 %635
    %v639 = vsel %vm369, %v634, 0
    %641 = vmatprep.subr.bf16.mxu0 0
    %642 = vmatpush1.bf16.msra.mxu0 %v636
    %643 = vmatprep.subr.bf16.mxu0 0
    %644 = vmatpush1.bf16.msra.mxu0 0
    %645 = vmatprep.subr.bf16.mxu0 0
    %646 = vmatpush1.bf16.msra.mxu0 0
    %647 = vmatprep.subr.bf16.mxu0 0
    %648 = vmatpush1.bf16.msra.mxu0 0
    %649 = vmatprep.subr.bf16.mxu0 0
    %650 = vmatpush1.bf16.msra.mxu0 0
    %651 = vmatprep.subr.bf16.mxu0 0
    %652 = vmatpush1.bf16.msra.mxu0 0
    %653 = vmatprep.subr.bf16.mxu0 0
    %654 = vmatpush1.bf16.msra.mxu0 0
    %655 = vmatprep.subr.bf16.mxu0 0
    %656 = vmatpush1.bf16.msra.mxu0 0
    %657 = vmatprep.subr.bf16.mxu0 0
    %658 = vmatpush1.bf16.msra.mxu0 0
    %659 = vmatprep.subr.bf16.mxu0 0
    %660 = vmatpush1.bf16.msra.mxu0 0
    %661 = vmatprep.subr.bf16.mxu0 0
    %662 = vmatpush1.bf16.msra.mxu0 0
    %663 = vmatprep.subr.bf16.mxu0 0
    %664 = vmatpush1.bf16.msra.mxu0 0
    %665 = vmatprep.subr.bf16.mxu0 0
    %666 = vmatpush1.bf16.msra.mxu0 0
    %667 = vmatprep.subr.bf16.mxu0 0
    %668 = vmatpush1.bf16.msra.mxu0 0
    %669 = vmatprep.subr.bf16.mxu0 0
    %670 = vmatpush1.bf16.msra.mxu0 0
    %671 = vmatprep.subr.bf16.mxu0 0
    %672 = vmatpush1.bf16.msra.mxu0 0
    %673 = vmatprep.mubr.bf16.mxu0 0
    %674 = vmatmul.mubr.bf16.gmra.mrb[0].mxu0 %v639
    %v675 = vpop.f32.mrb[0].mxu0
    %v676 = vadd.f32 0.0, %v675
    %v677 = vpop.f32.mrb[0].mxu0
    %v678 = vpop.f32.mrb[0].mxu0
    %v679 = vadd.f32 0.0, %v678
    %v680 = vpop.f32.mrb[0].mxu0
    %681 = vdwg.mxu0
    %682 = vrot.lane.b32.xlu0 %v317, 104
    %v683 = vpop.permute.xlu0 %682
    %684 = vrot.lane.b32.xlu0 %v317, 72
    %v685 = vpop.permute.xlu0 %684
    %v687 = vsel %vm321, %v683, 0
    %v690 = vsel %vm321, %v685, 0
    %692 = vmatprep.subr.bf16.mxu0 0
    %693 = vmatpush1.bf16.xpose.msra.mxu0 %v690
    %694 = vmatprep.subr.bf16.mxu0 0
    %695 = vmatpush1.bf16.xpose.msra.mxu0 0
    %696 = vmatprep.subr.bf16.mxu0 0
    %697 = vmatpush1.bf16.xpose.msra.mxu0 0
    %698 = vmatprep.subr.bf16.mxu0 0
    %699 = vmatpush1.bf16.xpose.msra.mxu0 0
    %700 = vmatprep.subr.bf16.mxu0 0
    %701 = vmatpush1.bf16.xpose.msra.mxu0 0
    %702 = vmatprep.subr.bf16.mxu0 0
    %703 = vmatpush1.bf16.xpose.msra.mxu0 0
    %704 = vmatprep.subr.bf16.mxu0 0
    %705 = vmatpush1.bf16.xpose.msra.mxu0 0
    %706 = vmatprep.subr.bf16.mxu0 0
    %707 = vmatpush1.bf16.xpose.msra.mxu0 0
    %708 = vmatprep.subr.bf16.mxu0 0
    %709 = vmatpush1.bf16.xpose.msra.mxu0 0
    %710 = vmatprep.subr.bf16.mxu0 0
    %711 = vmatpush1.bf16.xpose.msra.mxu0 0
    %712 = vmatprep.subr.bf16.mxu0 0
    %713 = vmatpush1.bf16.xpose.msra.mxu0 0
    %714 = vmatprep.subr.bf16.mxu0 0
    %715 = vmatpush1.bf16.xpose.msra.mxu0 0
    %716 = vmatprep.subr.bf16.mxu0 0
    %717 = vmatpush1.bf16.xpose.msra.mxu0 0
    %718 = vmatprep.subr.bf16.mxu0 0
    %719 = vmatpush1.bf16.xpose.msra.mxu0 0
    %720 = vmatprep.subr.bf16.mxu0 0
    %721 = vmatpush1.bf16.xpose.msra.mxu0 0
    %722 = vmatprep.subr.bf16.mxu0 0
    %723 = vmatpush1.bf16.xpose.msra.mxu0 0
    %724 = vmatprep.mubr.bf16.mxu0 0
    %725 = vmatmul.mubr.bf16.gmra.mrb[0].mxu0 %v687
    %v726 = vpop.f32.mrb[0].mxu0
    %v727 = vadd.f32 %v171, %v726
    %v728 = vpop.f32.mrb[0].mxu0
    %v729 = vpop.f32.mrb[0].mxu0
    %v730 = vadd.f32 %v172, %v729
    %v731 = vpop.f32.mrb[0].mxu0
    %732 = vdwg.mxu0
    %v733 = vsel %vm369, %v727, -inf
    %734 = vmax.xlane.f32.xlu0 %v733
    %v735 = vpop.xlane.xlu0 %734
    %v736 = vsel %vm369, %v730, -inf
    %737 = vmax.xlane.f32.xlu0 %v736
    %v738 = vpop.xlane.xlu0 %737
    %v739 = vsub.f32 %v727, %v735
    %v740 = vsub.f32 %v730, %v738
    %v741 = vmul.f32 %v739, 1.442695
    %v742 = vpow.pop %v741
    %v743 = vmul.f32 %v740, 1.442695
    %v744 = vpow.pop %v743
    %v745 = vsel %vm369, %v742, 0.0
    %746 = vadd.xlane.f32.xlu0 %v745
    %v747 = vpop.xlane.xlu0 %746
    %v748 = vsel %vm369, %v744, 0.0
    %749 = vadd.xlane.f32.xlu0 %v748
    %v750 = vpop.xlane.xlu0 %749
    %v751 = vrcp.pop %v747
    %v752 = vrcp.pop %v750
    %v753 = vmul.f32 %v742, %v751
    %v754 = vmul.f32 %v744, %v752
    %v755 = vpack.c.bf16 %v754, %v753
    %756 = vrot.lane.b32.xlu0 %v317, 40
    %v757 = vpop.permute.xlu0 %756
    %v760 = vsel %vm369, %v755, 0
    %762 = vmatprep.subr.bf16.mxu0 0
    %763 = vmatpush1.bf16.msra.mxu0 %v757
    %764 = vmatprep.subr.bf16.mxu0 0
    %765 = vmatpush1.bf16.msra.mxu0 0
    %766 = vmatprep.subr.bf16.mxu0 0
    %767 = vmatpush1.bf16.msra.mxu0 0
    %768 = vmatprep.subr.bf16.mxu0 0
    %769 = vmatpush1.bf16.msra.mxu0 0
    %770 = vmatprep.subr.bf16.mxu0 0
    %771 = vmatpush1.bf16.msra.mxu0 0
    %772 = vmatprep.subr.bf16.mxu0 0
    %773 = vmatpush1.bf16.msra.mxu0 0
    %774 = vmatprep.subr.bf16.mxu0 0
    %775 = vmatpush1.bf16.msra.mxu0 0
    %776 = vmatprep.subr.bf16.mxu0 0
    %777 = vmatpush1.bf16.msra.mxu0 0
    %778 = vmatprep.subr.bf16.mxu0 0
    %779 = vmatpush1.bf16.msra.mxu0 0
    %780 = vmatprep.subr.bf16.mxu0 0
    %781 = vmatpush1.bf16.msra.mxu0 0
    %782 = vmatprep.subr.bf16.mxu0 0
    %783 = vmatpush1.bf16.msra.mxu0 0
    %784 = vmatprep.subr.bf16.mxu0 0
    %785 = vmatpush1.bf16.msra.mxu0 0
    %786 = vmatprep.subr.bf16.mxu0 0
    %787 = vmatpush1.bf16.msra.mxu0 0
    %788 = vmatprep.subr.bf16.mxu0 0
    %789 = vmatpush1.bf16.msra.mxu0 0
    %790 = vmatprep.subr.bf16.mxu0 0
    %791 = vmatpush1.bf16.msra.mxu0 0
    %792 = vmatprep.subr.bf16.mxu0 0
    %793 = vmatpush1.bf16.msra.mxu0 0
    %794 = vmatprep.mubr.bf16.mxu0 0
    %795 = vmatmul.mubr.bf16.gmra.mrb[0].mxu0 %v760
    %v796 = vpop.f32.mrb[0].mxu0
    %v797 = vadd.f32 0.0, %v796
    %v798 = vpop.f32.mrb[0].mxu0
    %v799 = vpop.f32.mrb[0].mxu0
    %v800 = vadd.f32 0.0, %v799
    %v801 = vpop.f32.mrb[0].mxu0
    %802 = vdwg.mxu0
    %805 = vrot.lane.b32.xlu0 %v555, 8
    %v806 = vpop.permute.xlu0 %805
    %807 = vrot.lane.b32.xlu0 %v558, 8
    %v808 = vpop.permute.xlu0 %807
    %813 = vrot.lane.b32.xlu0 %v676, 16
    %v814 = vpop.permute.xlu0 %813
    %815 = vrot.lane.b32.xlu0 %v679, 16
    %v816 = vpop.permute.xlu0 %815
    %821 = vrot.lane.b32.xlu0 %v797, 24
    %v822 = vpop.permute.xlu0 %821
    %823 = vrot.lane.b32.xlu0 %v800, 24
    %v824 = vpop.permute.xlu0 %823
    %v827 = vsel %vm321, %v434, %v806
    %v828 = vsel %vm321, %v437, %v808
    %v829 = vsel %vm369, %v827, %v814
    %v830 = vsel %vm369, %v828, %v816
    %vm831 = vcmask 195584
    %v832 = vsel %vm831, %v829, %v822
    %v833 = vsel %vm831, %v830, %v824
    %v834 = vpack.c.bf16 %v833, %v832
    %v835 = vld [vmem:[%s7] sm:$0xf]
    %v836 = vld [vmem:[%s7 + $0x4] sm:$0xf]
    %v837 = vld [vmem:[%s7 + $0x8] sm:$0xf]
    %v838 = vld [vmem:[%s7 + $0xc] sm:$0xf]
    %v839 = vld [vmem:[%s8] sm:$0x1]
    %v841 = vlaneseq
    %v842 = vshrl.u32 %v841, 7
    %v843 = vsub.s32 0, %v842
    %v844 = vrot.slane %v839, %v843
    %v850 = vunpack.c.l.b16 %v835
    %v851 = vunpack.c.l.b16 %v836
    %v852 = vunpack.c.l.b16 %v837
    %v853 = vunpack.c.l.b16 %v838
    %v854 = vpack.c.b16 %v851, %v850
    %v855 = vpack.c.b16 %v853, %v852
    %v859 = vsel %vm272, %v834, 0
    %861 = vmatprep.subr.bf16.mxu0 0
    %862 = vmatpush1.bf16.msra.mxu0 %v854
    %863 = vmatprep.subr.bf16.mxu0 0
    %864 = vmatpush1.bf16.msra.mxu0 %v855
    %865 = vmatprep.subr.bf16.mxu0 0
    %866 = vmatpush1.bf16.msra.mxu0 0
    %867 = vmatprep.subr.bf16.mxu0 0
    %868 = vmatpush1.bf16.msra.mxu0 0
    %869 = vmatprep.subr.bf16.mxu0 0
    %870 = vmatpush1.bf16.msra.mxu0 0
    %871 = vmatprep.subr.bf16.mxu0 0
    %872 = vmatpush1.bf16.msra.mxu0 0
    %873 = vmatprep.subr.bf16.mxu0 0
    %874 = vmatpush1.bf16.msra.mxu0 0
    %875 = vmatprep.subr.bf16.mxu0 0
    %876 = vmatpush1.bf16.msra.mxu0 0
    %877 = vmatprep.subr.bf16.mxu0 0
    %878 = vmatpush1.bf16.msra.mxu0 0
    %879 = vmatprep.subr.bf16.mxu0 0
    %880 = vmatpush1.bf16.msra.mxu0 0
    %881 = vmatprep.subr.bf16.mxu0 0
    %882 = vmatpush1.bf16.msra.mxu0 0
    %883 = vmatprep.subr.bf16.mxu0 0
    %884 = vmatpush1.bf16.msra.mxu0 0
    %885 = vmatprep.subr.bf16.mxu0 0
    %886 = vmatpush1.bf16.msra.mxu0 0
    %887 = vmatprep.subr.bf16.mxu0 0
    %888 = vmatpush1.bf16.msra.mxu0 0
    %889 = vmatprep.subr.bf16.mxu0 0
    %890 = vmatpush1.bf16.msra.mxu0 0
    %891 = vmatprep.subr.bf16.mxu0 0
    %892 = vmatpush1.bf16.msra.mxu0 0
    %893 = vmatprep.mubr.bf16.mxu0 0
    %894 = vmatmul.mubr.bf16.gmra.mrb[0].mxu0 %v859
    %v895 = vpop.f32.mrb[0].mxu0
    %v896 = vadd.f32 %v844, %v895
    %v897 = vpop.f32.mrb[0].mxu0
    %v898 = vpop.f32.mrb[0].mxu0
    %v899 = vadd.f32 %v844, %v898
    %v900 = vpop.f32.mrb[0].mxu0
    %901 = vdwg.mxu0
    %v902 = vadd.f32 %v246, %v896
    %v903 = vadd.f32 %v247, %v899
    %v904 = vld [vmem:[%s9] sm:$0x1]
    %v905 = vld [vmem:[%s10] sm:$0x1]
    %v906 = vsel %vm272, %v902, 0.0
    %907 = vadd.xlane.f32.xlu0 %v906
    %v908 = vpop.xlane.xlu0 %907
    %v909 = vsel %vm272, %v903, 0.0
    %910 = vadd.xlane.f32.xlu0 %v909
    %v911 = vpop.xlane.xlu0 %910
    %v912 = vrcp.pop 32.0
    %v913 = vmul.f32 %v908, %v912
    %v914 = vmul.f32 %v911, %v912
    %v915 = vsub.f32 %v902, %v913
    %v916 = vsub.f32 %v903, %v914
    %v917 = vmul.f32 %v915, %v915
    %v918 = vmul.f32 %v916, %v916
    %v919 = vsel %vm272, %v917, 0.0
    %920 = vadd.xlane.f32.xlu0 %v919
    %v921 = vpop.xlane.xlu0 %920
    %v922 = vsel %vm272, %v918, 0.0
    %923 = vadd.xlane.f32.xlu0 %v922
    %v924 = vpop.xlane.xlu0 %923
    %v925 = vmul.f32 %v921, %v912
    %v926 = vmul.f32 %v924, %v912
    %v927 = vadd.f32 %v925, 1e-05
    %v928 = vadd.f32 %v926, 1e-05
    %v929 = vrsqrt.pop %v927
    %v930 = vrsqrt.pop %v928
    %v931 = vmul.f32 %v915, %v929
    %v932 = vmul.f32 %v916, %v930
    %v934 = vlaneseq
    %v935 = vshrl.u32 %v934, 7
    %v936 = vsub.s32 0, %v935
    %v937 = vrot.slane %v904, %v936
    %v939 = vmul.f32 %v931, %v937
    %v940 = vmul.f32 %v932, %v937
    %v942 = vlaneseq
    %v943 = vshrl.u32 %v942, 7
    %v944 = vsub.s32 0, %v943
    %v945 = vrot.slane %v905, %v944
    %v947 = vadd.f32 %v939, %v945
    %v948 = vadd.f32 %v940, %v945
    %v949 = vpack.c.bf16 %v948, %v947
    %v950 = vld [vmem:[%s13] sm:$0xf]
    %v951 = vld [vmem:[%s13 + $0x4] sm:$0xf]
    %v952 = vld [vmem:[%s13 + $0x8] sm:$0xf]
    %v953 = vld [vmem:[%s13 + $0xc] sm:$0xf]
    %v954 = vld [vmem:[#allocation14] sm:$0x1]
    %v956 = vlaneseq
    %v957 = vshrl.u32 %v956, 7
    %v958 = vsub.s32 0, %v957
    %v959 = vrot.slane %v954, %v958
    %v965 = vunpack.c.l.b16 %v950
    %v966 = vunpack.c.l.b16 %v951
    %v967 = vunpack.c.l.b16 %v952
    %v968 = vunpack.c.l.b16 %v953
    %v969 = vpack.c.b16 %v966, %v965
    %v970 = vpack.c.b16 %v968, %v967
    %v974 = vsel %vm272, %v949, 0
    %976 = vmatprep.subr.bf16.mxu0 0
    %977 = vmatpush1.bf16.msra.mxu0 %v969
    %978 = vmatprep.subr.bf16.mxu0 0
    %979 = vmatpush1.bf16.msra.mxu0 %v970
    %980 = vmatprep.subr.bf16.mxu0 0
    %981 = vmatpush1.bf16.msra.mxu0 0
    %982 = vmatprep.subr.bf16.mxu0 0
    %983 = vmatpush1.bf16.msra.mxu0 0
    %984 = vmatprep.subr.bf16.mxu0 0
    %985 = vmatpush1.bf16.msra.mxu0 0
    %986 = vmatprep.subr.bf16.mxu0 0
    %987 = vmatpush1.bf16.msra.mxu0 0
    %988 = vmatprep.subr.bf16.mxu0 0
    %989 = vmatpush1.bf16.msra.mxu0 0
    %990 = vmatprep.subr.bf16.mxu0 0
    %991 = vmatpush1.bf16.msra.mxu0 0
    %992 = vmatprep.subr.bf16.mxu0 0
    %993 = vmatpush1.bf16.msra.mxu0 0
    %994 = vmatprep.subr.bf16.mxu0 0
    %995 = vmatpush1.bf16.msra.mxu0 0
    %996 = vmatprep.subr.bf16.mxu0 0
    %997 = vmatpush1.bf16.msra.mxu0 0
    %998 = vmatprep.subr.bf16.mxu0 0
    %999 = vmatpush1.bf16.msra.mxu0 0
    %1000 = vmatprep.subr.bf16.mxu0 0
    %1001 = vmatpush1.bf16.msra.mxu0 0
    %1002 = vmatprep.subr.bf16.mxu0 0
    %1003 = vmatpush1.bf16.msra.mxu0 0
    %1004 = vmatprep.subr.bf16.mxu0 0
    %1005 = vmatpush1.bf16.msra.mxu0 0
    %1006 = vmatprep.subr.bf16.mxu0 0
    %1007 = vmatpush1.bf16.msra.mxu0 0
    %1008 = vmatprep.mubr.bf16.mxu0 0
    %1009 = vmatmul.mubr.bf16.gmra.mrb[0].mxu0 %v974
    %v1010 = vpop.f32.mrb[0].mxu0
    %v1011 = vadd.f32 %v959, %v1010
    %v1012 = vpop.f32.mrb[0].mxu0
    %v1013 = vpop.f32.mrb[0].mxu0
    %v1014 = vadd.f32 %v959, %v1013
    %v1015 = vpop.f32.mrb[0].mxu0
    %1016 = vdwg.mxu0
    %v1017 = vmax.f32 %v1011, 0.0
    %v1018 = vmax.f32 %v1014, 0.0
    %v1019 = vpack.c.bf16 %v1018, %v1017
    %v1020 = vld [vmem:[%s15] sm:$0xf]
    %v1021 = vld [vmem:[%s15 + $0x4] sm:$0xf]
    %v1022 = vld [vmem:[%s15 + $0x8] sm:$0xf]
    %v1023 = vld [vmem:[%s15 + $0xc] sm:$0xf]
    %v1024 = vld [vmem:[%s15 + $0x10] sm:$0xf]
    %v1025 = vld [vmem:[%s15 + $0x14] sm:$0xf]
    %v1026 = vld [vmem:[%s15 + $0x18] sm:$0xf]
    %v1027 = vld [vmem:[%s15 + $0x1c] sm:$0xf]
    %v1028 = vld [vmem:[%s16] sm:$0x1]
    %v1030 = vlaneseq
    %v1031 = vshrl.u32 %v1030, 7
    %v1032 = vsub.s32 0, %v1031
    %v1033 = vrot.slane %v1028, %v1032
    %v1043 = vunpack.c.l.b16 %v1020
    %v1044 = vunpack.c.l.b16 %v1021
    %v1045 = vunpack.c.l.b16 %v1022
    %v1046 = vunpack.c.l.b16 %v1023
    %v1047 = vunpack.c.l.b16 %v1024
    %v1048 = vunpack.c.l.b16 %v1025
    %v1049 = vunpack.c.l.b16 %v1026
    %v1050 = vunpack.c.l.b16 %v1027
    %v1051 = vpack.c.b16 %v1044, %v1043
    %v1052 = vpack.c.b16 %v1046, %v1045
    %v1053 = vpack.c.b16 %v1048, %v1047
    %v1054 = vpack.c.b16 %v1050, %v1049
    %vm1059 = vcmask 523264
    %v1061 = vsel %vm1059, %v1019, 0
    %1063 = vmatprep.subr.bf16.mxu0 0
    %1064 = vmatpush1.bf16.msra.mxu0 %v1051
    %1065 = vmatprep.subr.bf16.mxu0 0
    %1066 = vmatpush1.bf16.msra.mxu0 %v1052
    %1067 = vmatprep.subr.bf16.mxu0 0
    %1068 = vmatpush1.bf16.msra.mxu0 %v1053
    %1069 = vmatprep.subr.bf16.mxu0 0
    %1070 = vmatpush1.bf16.msra.mxu0 %v1054
    %1071 = vmatprep.subr.bf16.mxu0 0
    %1072 = vmatpush1.bf16.msra.mxu0 0
    %1073 = vmatprep.subr.bf16.mxu0 0
    %1074 = vmatpush1.bf16.msra.mxu0 0
    %1075 = vmatprep.subr.bf16.mxu0 0
    %1076 = vmatpush1.bf16.msra.mxu0 0
    %1077 = vmatprep.subr.bf16.mxu0 0
    %1078 = vmatpush1.bf16.msra.mxu0 0
    %1079 = vmatprep.subr.bf16.mxu0 0
    %1080 = vmatpush1.bf16.msra.mxu0 0
    %1081 = vmatprep.subr.bf16.mxu0 0
    %1082 = vmatpush1.bf16.msra.mxu0 0
    %1083 = vmatprep.subr.bf16.mxu0 0
    %1084 = vmatpush1.bf16.msra.mxu0 0
    %1085 = vmatprep.subr.bf16.mxu0 0
    %1086 = vmatpush1.bf16.msra.mxu0 0
    %1087 = vmatprep.subr.bf16.mxu0 0
    %1088 = vmatpush1.bf16.msra.mxu0 0
    %1089 = vmatprep.subr.bf16.mxu0 0
    %1090 = vmatpush1.bf16.msra.mxu0 0
    %1091 = vmatprep.subr.bf16.mxu0 0
    %1092 = vmatpush1.bf16.msra.mxu0 0
    %1093 = vmatprep.subr.bf16.mxu0 0
    %1094 = vmatpush1.bf16.msra.mxu0 0
    %1095 = vmatprep.mubr.bf16.mxu0 0
    %1096 = vmatmul.mubr.bf16.gmra.mrb[0].mxu0 %v1061
    %v1097 = vpop.f32.mrb[0].mxu0
    %v1098 = vadd.f32 %v1033, %v1097
    %v1099 = vpop.f32.mrb[0].mxu0
    %v1100 = vpop.f32.mrb[0].mxu0
    %v1101 = vadd.f32 %v1033, %v1100
    %v1102 = vpop.f32.mrb[0].mxu0
    %1103 = vdwg.mxu0
    %v1104 = vadd.f32 %v947, %v1098
    %v1105 = vadd.f32 %v948, %v1101
    %v1106 = vld [vmem:[#allocation11] sm:$0x1]
    %v1107 = vld [vmem:[#allocation13] sm:$0x1]
    %v1108 = vsel %vm272, %v1104, 0.0
    %1109 = vadd.xlane.f32.xlu0 %v1108
    %v1110 = vpop.xlane.xlu0 %1109
    %v1111 = vsel %vm272, %v1105, 0.0
    %1112 = vadd.xlane.f32.xlu0 %v1111
    %v1113 = vpop.xlane.xlu0 %1112
    %v1114 = vmul.f32 %v1110, %v912
    %v1115 = vmul.f32 %v1113, %v912
    %v1116 = vsub.f32 %v1104, %v1114
    %v1117 = vsub.f32 %v1105, %v1115
    %v1118 = vmul.f32 %v1116, %v1116
    %v1119 = vmul.f32 %v1117, %v1117
    %v1120 = vsel %vm272, %v1118, 0.0
    %1121 = vadd.xlane.f32.xlu0 %v1120
    %v1122 = vpop.xlane.xlu0 %1121
    %v1123 = vsel %vm272, %v1119, 0.0
    %1124 = vadd.xlane.f32.xlu0 %v1123
    %v1125 = vpop.xlane.xlu0 %1124
    %v1126 = vmul.f32 %v1122, %v912
    %v1127 = vmul.f32 %v1125, %v912
    %v1128 = vadd.f32 %v1126, 1e-05
    %v1129 = vadd.f32 %v1127, 1e-05
    %v1130 = vrsqrt.pop %v1128
    %v1131 = vrsqrt.pop %v1129
    %v1132 = vmul.f32 %v1116, %v1130
    %v1133 = vmul.f32 %v1117, %v1131
    %v1135 = vlaneseq
    %v1136 = vshrl.u32 %v1135, 7
    %v1137 = vsub.s32 0, %v1136
    %v1138 = vrot.slane %v1106, %v1137
    %v1140 = vmul.f32 %v1132, %v1138
    %v1141 = vmul.f32 %v1133, %v1138
    %v1143 = vlaneseq
    %v1144 = vshrl.u32 %v1143, 7
    %v1145 = vsub.s32 0, %v1144
    %v1146 = vrot.slane %v1107, %v1145
    %v1148 = vadd.f32 %v1140, %v1146
    %v1149 = vadd.f32 %v1141, %v1146
    %v1150 = vpack.c.bf16 %v1149, %v1148
    %s1151 = scalar_lea.vmem %s5, 16
    %v1152 = vld [vmem:[%s1151] sm:$0xf]
    %v1153 = vld [vmem:[%s1151 + $0x4] sm:$0xf]
    %v1154 = vld [vmem:[%s1151 + $0x8] sm:$0xf]
    %v1155 = vld [vmem:[%s1151 + $0xc] sm:$0xf]
    %s1156 = scalar_lea.vmem %s6, 1
    %v1157 = vld [vmem:[%s1156] sm:$0x1]
    %v1159 = vlaneseq
    %v1160 = vshrl.u32 %v1159, 7
    %v1161 = vsub.s32 0, %v1160
    %v1162 = vrot.slane %v1157, %v1161
    %v1168 = vunpack.c.l.b16 %v1152
    %v1169 = vunpack.c.l.b16 %v1153
    %v1170 = vunpack.c.l.b16 %v1154
    %v1171 = vunpack.c.l.b16 %v1155
    %v1172 = vpack.c.b16 %v1169, %v1168
    %v1173 = vpack.c.b16 %v1171, %v1170
    %v1177 = vsel %vm272, %v1150, 0
    %1179 = vmatprep.subr.bf16.mxu0 0
    %1180 = vmatpush1.bf16.msra.mxu0 %v1172
    %1181 = vmatprep.subr.bf16.mxu0 0
    %1182 = vmatpush1.bf16.msra.mxu0 %v1173
    %1183 = vmatprep.subr.bf16.mxu0 0
    %1184 = vmatpush1.bf16.msra.mxu0 0
    %1185 = vmatprep.subr.bf16.mxu0 0
    %1186 = vmatpush1.bf16.msra.mxu0 0
    %1187 = vmatprep.subr.bf16.mxu0 0
    %1188 = vmatpush1.bf16.msra.mxu0 0
    %1189 = vmatprep.subr.bf16.mxu0 0
    %1190 = vmatpush1.bf16.msra.mxu0 0
    %1191 = vmatprep.subr.bf16.mxu0 0
    %1192 = vmatpush1.bf16.msra.mxu0 0
    %1193 = vmatprep.subr.bf16.mxu0 0
    %1194 = vmatpush1.bf16.msra.mxu0 0
    %1195 = vmatprep.subr.bf16.mxu0 0
    %1196 = vmatpush1.bf16.msra.mxu0 0
    %1197 = vmatprep.subr.bf16.mxu0 0
    %1198 = vmatpush1.bf16.msra.mxu0 0
    %1199 = vmatprep.subr.bf16.mxu0 0
    %1200 = vmatpush1.bf16.msra.mxu0 0
    %1201 = vmatprep.subr.bf16.mxu0 0
    %1202 = vmatpush1.bf16.msra.mxu0 0
    %1203 = vmatprep.subr.bf16.mxu0 0
    %1204 = vmatpush1.bf16.msra.mxu0 0
    %1205 = vmatprep.subr.bf16.mxu0 0
    %1206 = vmatpush1.bf16.msra.mxu0 0
    %1207 = vmatprep.subr.bf16.mxu0 0
    %1208 = vmatpush1.bf16.msra.mxu0 0
    %1209 = vmatprep.subr.bf16.mxu0 0
    %1210 = vmatpush1.bf16.msra.mxu0 0
    %1211 = vmatprep.mubr.bf16.mxu0 0
    %1212 = vmatmul.mubr.bf16.gmra.mrb[0].mxu0 %v1177
    %v1213 = vpop.f32.mrb[0].mxu0
    %v1214 = vadd.f32 %v1162, %v1213
    %v1215 = vpop.f32.mrb[0].mxu0
    %v1216 = vpop.f32.mrb[0].mxu0
    %v1217 = vadd.f32 %v1162, %v1216
    %v1218 = vpop.f32.mrb[0].mxu0
    %1219 = vdwg.mxu0
    %v1220 = vpack.c.bf16 %v1217, %v1214
    %1222 = vrot.lane.b32.xlu0 %v1220, 96
    %v1223 = vpop.permute.xlu0 %1222
    %v1225 = vsel %vm321, %v1220, 0
    %v1228 = vsel %vm321, %v1223, 0
    %1230 = vmatprep.subr.bf16.mxu0 0
    %1231 = vmatpush1.bf16.xpose.msra.mxu0 %v1228
    %1232 = vmatprep.subr.bf16.mxu0 0
    %1233 = vmatpush1.bf16.xpose.msra.mxu0 0
    %1234 = vmatprep.subr.bf16.mxu0 0
    %1235 = vmatpush1.bf16.xpose.msra.mxu0 0
    %1236 = vmatprep.subr.bf16.mxu0 0
    %1237 = vmatpush1.bf16.xpose.msra.mxu0 0
    %1238 = vmatprep.subr.bf16.mxu0 0
    %1239 = vmatpush1.bf16.xpose.msra.mxu0 0
    %1240 = vmatprep.subr.bf16.mxu0 0
    %1241 = vmatpush1.bf16.xpose.msra.mxu0 0
    %1242 = vmatprep.subr.bf16.mxu0 0
    %1243 = vmatpush1.bf16.xpose.msra.mxu0 0
    %1244 = vmatprep.subr.bf16.mxu0 0
    %1245 = vmatpush1.bf16.xpose.msra.mxu0 0
    %1246 = vmatprep.subr.bf16.mxu0 0
    %1247 = vmatpush1.bf16.xpose.msra.mxu0 0
    %1248 = vmatprep.subr.bf16.mxu0 0
    %1249 = vmatpush1.bf16.xpose.msra.mxu0 0
    %1250 = vmatprep.subr.bf16.mxu0 0
    %1251 = vmatpush1.bf16.xpose.msra.mxu0 0
    %1252 = vmatprep.subr.bf16.mxu0 0
    %1253 = vmatpush1.bf16.xpose.msra.mxu0 0
    %1254 = vmatprep.subr.bf16.mxu0 0
    %1255 = vmatpush1.bf16.xpose.msra.mxu0 0
    %1256 = vmatprep.subr.bf16.mxu0 0
    %1257 = vmatpush1.bf16.xpose.msra.mxu0 0
    %1258 = vmatprep.subr.bf16.mxu0 0
    %1259 = vmatpush1.bf16.xpose.msra.mxu0 0
    %1260 = vmatprep.subr.bf16.mxu0 0
    %1261 = vmatpush1.bf16.xpose.msra.mxu0 0
    %1262 = vmatprep.mubr.bf16.mxu0 0
    %1263 = vmatmul.mubr.bf16.gmra.mrb[0].mxu0 %v1225
    %v1264 = vpop.f32.mrb[0].mxu0
    %v1265 = vadd.f32 %v171, %v1264
    %v1266 = vpop.f32.mrb[0].mxu0
    %v1267 = vpop.f32.mrb[0].mxu0
    %v1268 = vadd.f32 %v172, %v1267
    %v1269 = vpop.f32.mrb[0].mxu0
    %1270 = vdwg.mxu0
    %v1271 = vsel %vm369, %v1265, -inf
    %1272 = vmax.xlane.f32.xlu0 %v1271
    %v1273 = vpop.xlane.xlu0 %1272
    %v1274 = vsel %vm369, %v1268, -inf
    %1275 = vmax.xlane.f32.xlu0 %v1274
    %v1276 = vpop.xlane.xlu0 %1275
    %v1277 = vsub.f32 %v1265, %v1273
    %v1278 = vsub.f32 %v1268, %v1276
    %v1279 = vmul.f32 %v1277, 1.442695
    %v1280 = vpow.pop %v1279
    %v1281 = vmul.f32 %v1278, 1.442695
    %v1282 = vpow.pop %v1281
    %v1283 = vsel %vm369, %v1280, 0.0
    %1284 = vadd.xlane.f32.xlu0 %v1283
    %v1285 = vpop.xlane.xlu0 %1284
    %v1286 = vsel %vm369, %v1282, 0.0
    %1287 = vadd.xlane.f32.xlu0 %v1286
    %v1288 = vpop.xlane.xlu0 %1287
    %v1289 = vrcp.pop %v1285
    %v1290 = vrcp.pop %v1288
    %v1291 = vmul.f32 %v1280, %v1289
    %v1292 = vmul.f32 %v1282, %v1290
    %v1293 = vpack.c.bf16 %v1292, %v1291
    %1294 = vrot.lane.b32.xlu0 %v1220, 64
    %v1295 = vpop.permute.xlu0 %1294
    %v1298 = vsel %vm369, %v1293, 0
    %1300 = vmatprep.subr.bf16.mxu0 0
    %1301 = vmatpush1.bf16.msra.mxu0 %v1295
    %1302 = vmatprep.subr.bf16.mxu0 0
    %1303 = vmatpush1.bf16.msra.mxu0 0
    %1304 = vmatprep.subr.bf16.mxu0 0
    %1305 = vmatpush1.bf16.msra.mxu0 0
    %1306 = vmatprep.subr.bf16.mxu0 0
    %1307 = vmatpush1.bf16.msra.mxu0 0
    %1308 = vmatprep.subr.bf16.mxu0 0
    %1309 = vmatpush1.bf16.msra.mxu0 0
    %1310 = vmatprep.subr.bf16.mxu0 0
    %1311 = vmatpush1.bf16.msra.mxu0 0
    %1312 = vmatprep.subr.bf16.mxu0 0
    %1313 = vmatpush1.bf16.msra.mxu0 0
    %1314 = vmatprep.subr.bf16.mxu0 0
    %1315 = vmatpush1.bf16.msra.mxu0 0
    %1316 = vmatprep.subr.bf16.mxu0 0
    %1317 = vmatpush1.bf16.msra.mxu0 0
    %1318 = vmatprep.subr.bf16.mxu0 0
    %1319 = vmatpush1.bf16.msra.mxu0 0
    %1320 = vmatprep.subr.bf16.mxu0 0
    %1321 = vmatpush1.bf16.msra.mxu0 0
    %1322 = vmatprep.subr.bf16.mxu0 0
    %1323 = vmatpush1.bf16.msra.mxu0 0
    %1324 = vmatprep.subr.bf16.mxu0 0
    %1325 = vmatpush1.bf16.msra.mxu0 0
    %1326 = vmatprep.subr.bf16.mxu0 0
    %1327 = vmatpush1.bf16.msra.mxu0 0
    %1328 = vmatprep.subr.bf16.mxu0 0
    %1329 = vmatpush1.bf16.msra.mxu0 0
    %1330 = vmatprep.subr.bf16.mxu0 0
    %1331 = vmatpush1.bf16.msra.mxu0 0
    %1332 = vmatprep.mubr.bf16.mxu0 0
    %1333 = vmatmul.mubr.bf16.gmra.mrb[0].mxu0 %v1298
    %v1334 = vpop.f32.mrb[0].mxu0
    %v1335 = vadd.f32 0.0, %v1334
    %v1336 = vpop.f32.mrb[0].mxu0
    %v1337 = vpop.f32.mrb[0].mxu0
    %v1338 = vadd.f32 0.0, %v1337
    %v1339 = vpop.f32.mrb[0].mxu0
    %1340 = vdwg.mxu0
    %1341 = vrot.lane.b32.xlu0 %v1220, 120
    %v1342 = vpop.permute.xlu0 %1341
    %1343 = vrot.lane.b32.xlu0 %v1220, 88
    %v1344 = vpop.permute.xlu0 %1343
    %v1346 = vsel %vm321, %v1342, 0
    %v1349 = vsel %vm321, %v1344, 0
    %1351 = vmatprep.subr.bf16.mxu0 0
    %1352 = vmatpush1.bf16.xpose.msra.mxu0 %v1349
    %1353 = vmatprep.subr.bf16.mxu0 0
    %1354 = vmatpush1.bf16.xpose.msra.mxu0 0
    %1355 = vmatprep.subr.bf16.mxu0 0
    %1356 = vmatpush1.bf16.xpose.msra.mxu0 0
    %1357 = vmatprep.subr.bf16.mxu0 0
    %1358 = vmatpush1.bf16.xpose.msra.mxu0 0
    %1359 = vmatprep.subr.bf16.mxu0 0
    %1360 = vmatpush1.bf16.xpose.msra.mxu0 0
    %1361 = vmatprep.subr.bf16.mxu0 0
    %1362 = vmatpush1.bf16.xpose.msra.mxu0 0
    %1363 = vmatprep.subr.bf16.mxu0 0
    %1364 = vmatpush1.bf16.xpose.msra.mxu0 0
    %1365 = vmatprep.subr.bf16.mxu0 0
    %1366 = vmatpush1.bf16.xpose.msra.mxu0 0
    %1367 = vmatprep.subr.bf16.mxu0 0
    %1368 = vmatpush1.bf16.xpose.msra.mxu0 0
    %1369 = vmatprep.subr.bf16.mxu0 0
    %1370 = vmatpush1.bf16.xpose.msra.mxu0 0
    %1371 = vmatprep.subr.bf16.mxu0 0
    %1372 = vmatpush1.bf16.xpose.msra.mxu0 0
    %1373 = vmatprep.subr.bf16.mxu0 0
    %1374 = vmatpush1.bf16.xpose.msra.mxu0 0
    %1375 = vmatprep.subr.bf16.mxu0 0
    %1376 = vmatpush1.bf16.xpose.msra.mxu0 0
    %1377 = vmatprep.subr.bf16.mxu0 0
    %1378 = vmatpush1.bf16.xpose.msra.mxu0 0
    %1379 = vmatprep.subr.bf16.mxu0 0
    %1380 = vmatpush1.bf16.xpose.msra.mxu0 0
    %1381 = vmatprep.subr.bf16.mxu0 0
    %1382 = vmatpush1.bf16.xpose.msra.mxu0 0
    %1383 = vmatprep.mubr.bf16.mxu0 0
    %1384 = vmatmul.mubr.bf16.gmra.mrb[0].mxu0 %v1346
    %v1385 = vpop.f32.mrb[0].mxu0
    %v1386 = vadd.f32 %v171, %v1385
    %v1387 = vpop.f32.mrb[0].mxu0
    %v1388 = vpop.f32.mrb[0].mxu0
    %v1389 = vadd.f32 %v172, %v1388
    %v1390 = vpop.f32.mrb[0].mxu0
    %1391 = vdwg.mxu0
    %v1392 = vsel %vm369, %v1386, -inf
    %1393 = vmax.xlane.f32.xlu0 %v1392
    %v1394 = vpop.xlane.xlu0 %1393
    %v1395 = vsel %vm369, %v1389, -inf
    %1396 = vmax.xlane.f32.xlu0 %v1395
    %v1397 = vpop.xlane.xlu0 %1396
    %v1398 = vsub.f32 %v1386, %v1394
    %v1399 = vsub.f32 %v1389, %v1397
    %v1400 = vmul.f32 %v1398, 1.442695
    %v1401 = vpow.pop %v1400
    %v1402 = vmul.f32 %v1399, 1.442695
    %v1403 = vpow.pop %v1402
    %v1404 = vsel %vm369, %v1401, 0.0
    %1405 = vadd.xlane.f32.xlu0 %v1404
    %v1406 = vpop.xlane.xlu0 %1405
    %v1407 = vsel %vm369, %v1403, 0.0
    %1408 = vadd.xlane.f32.xlu0 %v1407
    %v1409 = vpop.xlane.xlu0 %1408
    %v1410 = vrcp.pop %v1406
    %v1411 = vrcp.pop %v1409
    %v1412 = vmul.f32 %v1401, %v1410
    %v1413 = vmul.f32 %v1403, %v1411
    %v1414 = vpack.c.bf16 %v1413, %v1412
    %1415 = vrot.lane.b32.xlu0 %v1220, 56
    %v1416 = vpop.permute.xlu0 %1415
    %v1419 = vsel %vm369, %v1414, 0
    %1421 = vmatprep.subr.bf16.mxu0 0
    %1422 = vmatpush1.bf16.msra.mxu0 %v1416
    %1423 = vmatprep.subr.bf16.mxu0 0
    %1424 = vmatpush1.bf16.msra.mxu0 0
    %1425 = vmatprep.subr.bf16.mxu0 0
    %1426 = vmatpush1.bf16.msra.mxu0 0
    %1427 = vmatprep.subr.bf16.mxu0 0
    %1428 = vmatpush1.bf16.msra.mxu0 0
    %1429 = vmatprep.subr.bf16.mxu0 0
    %1430 = vmatpush1.bf16.msra.mxu0 0
    %1431 = vmatprep.subr.bf16.mxu0 0
    %1432 = vmatpush1.bf16.msra.mxu0 0
    %1433 = vmatprep.subr.bf16.mxu0 0
    %1434 = vmatpush1.bf16.msra.mxu0 0
    %1435 = vmatprep.subr.bf16.mxu0 0
    %1436 = vmatpush1.bf16.msra.mxu0 0
    %1437 = vmatprep.subr.bf16.mxu0 0
    %1438 = vmatpush1.bf16.msra.mxu0 0
    %1439 = vmatprep.subr.bf16.mxu0 0
    %1440 = vmatpush1.bf16.msra.mxu0 0
    %1441 = vmatprep.subr.bf16.mxu0 0
    %1442 = vmatpush1.bf16.msra.mxu0 0
    %1443 = vmatprep.subr.bf16.mxu0 0
    %1444 = vmatpush1.bf16.msra.mxu0 0
    %1445 = vmatprep.subr.bf16.mxu0 0
    %1446 = vmatpush1.bf16.msra.mxu0 0
    %1447 = vmatprep.subr.bf16.mxu0 0
    %1448 = vmatpush1.bf16.msra.mxu0 0
    %1449 = vmatprep.subr.bf16.mxu0 0
    %1450 = vmatpush1.bf16.msra.mxu0 0
    %1451 = vmatprep.subr.bf16.mxu0 0
    %1452 = vmatpush1.bf16.msra.mxu0 0
    %1453 = vmatprep.mubr.bf16.mxu0 0
    %1454 = vmatmul.mubr.bf16.gmra.mrb[0].mxu0 %v1419
    %v1455 = vpop.f32.mrb[0].mxu0
    %v1456 = vadd.f32 0.0, %v1455
    %v1457 = vpop.f32.mrb[0].mxu0
    %v1458 = vpop.f32.mrb[0].mxu0
    %v1459 = vadd.f32 0.0, %v1458
    %v1460 = vpop.f32.mrb[0].mxu0
    %1461 = vdwg.mxu0
    %1462 = vrot.lane.b32.xlu0 %v1220, 112
    %v1463 = vpop.permute.xlu0 %1462
    %1464 = vrot.lane.b32.xlu0 %v1220, 80
    %v1465 = vpop.permute.xlu0 %1464
    %v1467 = vsel %vm321, %v1463, 0
    %v1470 = vsel %vm321, %v1465, 0
    %1472 = vmatprep.subr.bf16.mxu0 0
    %1473 = vmatpush1.bf16.xpose.msra.mxu0 %v1470
    %1474 = vmatprep.subr.bf16.mxu0 0
    %1475 = vmatpush1.bf16.xpose.msra.mxu0 0
    %1476 = vmatprep.subr.bf16.mxu0 0
    %1477 = vmatpush1.bf16.xpose.msra.mxu0 0
    %1478 = vmatprep.subr.bf16.mxu0 0
    %1479 = vmatpush1.bf16.xpose.msra.mxu0 0
    %1480 = vmatprep.subr.bf16.mxu0 0
    %1481 = vmatpush1.bf16.xpose.msra.mxu0 0
    %1482 = vmatprep.subr.bf16.mxu0 0
    %1483 = vmatpush1.bf16.xpose.msra.mxu0 0
    %1484 = vmatprep.subr.bf16.mxu0 0
    %1485 = vmatpush1.bf16.xpose.msra.mxu0 0
    %1486 = vmatprep.subr.bf16.mxu0 0
    %1487 = vmatpush1.bf16.xpose.msra.mxu0 0
    %1488 = vmatprep.subr.bf16.mxu0 0
    %1489 = vmatpush1.bf16.xpose.msra.mxu0 0
    %1490 = vmatprep.subr.bf16.mxu0 0
    %1491 = vmatpush1.bf16.xpose.msra.mxu0 0
    %1492 = vmatprep.subr.bf16.mxu0 0
    %1493 = vmatpush1.bf16.xpose.msra.mxu0 0
    %1494 = vmatprep.subr.bf16.mxu0 0
    %1495 = vmatpush1.bf16.xpose.msra.mxu0 0
    %1496 = vmatprep.subr.bf16.mxu0 0
    %1497 = vmatpush1.bf16.xpose.msra.mxu0 0
    %1498 = vmatprep.subr.bf16.mxu0 0
    %1499 = vmatpush1.bf16.xpose.msra.mxu0 0
    %1500 = vmatprep.subr.bf16.mxu0 0
    %1501 = vmatpush1.bf16.xpose.msra.mxu0 0
    %1502 = vmatprep.subr.bf16.mxu0 0
    %1503 = vmatpush1.bf16.xpose.msra.mxu0 0
    %1504 = vmatprep.mubr.bf16.mxu0 0
    %1505 = vmatmul.mubr.bf16.gmra.mrb[0].mxu0 %v1467
    %v1506 = vpop.f32.mrb[0].mxu0
    %v1507 = vadd.f32 %v171, %v1506
    %v1508 = vpop.f32.mrb[0].mxu0
    %v1509 = vpop.f32.mrb[0].mxu0
    %v1510 = vadd.f32 %v172, %v1509
    %v1511 = vpop.f32.mrb[0].mxu0
    %1512 = vdwg.mxu0
    %v1513 = vsel %vm369, %v1507, -inf
    %1514 = vmax.xlane.f32.xlu0 %v1513
    %v1515 = vpop.xlane.xlu0 %1514
    %v1516 = vsel %vm369, %v1510, -inf
    %1517 = vmax.xlane.f32.xlu0 %v1516
    %v1518 = vpop.xlane.xlu0 %1517
    %v1519 = vsub.f32 %v1507, %v1515
    %v1520 = vsub.f32 %v1510, %v1518
    %v1521 = vmul.f32 %v1519, 1.442695
    %v1522 = vpow.pop %v1521
    %v1523 = vmul.f32 %v1520, 1.442695
    %v1524 = vpow.pop %v1523
    %v1525 = vsel %vm369, %v1522, 0.0
    %1526 = vadd.xlane.f32.xlu0 %v1525
    %v1527 = vpop.xlane.xlu0 %1526
    %v1528 = vsel %vm369, %v1524, 0.0
    %1529 = vadd.xlane.f32.xlu0 %v1528
    %v1530 = vpop.xlane.xlu0 %1529
    %v1531 = vrcp.pop %v1527
    %v1532 = vrcp.pop %v1530
    %v1533 = vmul.f32 %v1522, %v1531
    %v1534 = vmul.f32 %v1524, %v1532
    %v1535 = vpack.c.bf16 %v1534, %v1533
    %1536 = vrot.lane.b32.xlu0 %v1220, 48
    %v1537 = vpop.permute.xlu0 %1536
    %v1540 = vsel %vm369, %v1535, 0
    %1542 = vmatprep.subr.bf16.mxu0 0
    %1543 = vmatpush1.bf16.msra.mxu0 %v1537
    %1544 = vmatprep.subr.bf16.mxu0 0
    %1545 = vmatpush1.bf16.msra.mxu0 0
    %1546 = vmatprep.subr.bf16.mxu0 0
    %1547 = vmatpush1.bf16.msra.mxu0 0
    %1548 = vmatprep.subr.bf16.mxu0 0
    %1549 = vmatpush1.bf16.msra.mxu0 0
    %1550 = vmatprep.subr.bf16.mxu0 0
    %1551 = vmatpush1.bf16.msra.mxu0 0
    %1552 = vmatprep.subr.bf16.mxu0 0
    %1553 = vmatpush1.bf16.msra.mxu0 0
    %1554 = vmatprep.subr.bf16.mxu0 0
    %1555 = vmatpush1.bf16.msra.mxu0 0
    %1556 = vmatprep.subr.bf16.mxu0 0
    %1557 = vmatpush1.bf16.msra.mxu0 0
    %1558 = vmatprep.subr.bf16.mxu0 0
    %1559 = vmatpush1.bf16.msra.mxu0 0
    %1560 = vmatprep.subr.bf16.mxu0 0
    %1561 = vmatpush1.bf16.msra.mxu0 0
    %1562 = vmatprep.subr.bf16.mxu0 0
    %1563 = vmatpush1.bf16.msra.mxu0 0
    %1564 = vmatprep.subr.bf16.mxu0 0
    %1565 = vmatpush1.bf16.msra.mxu0 0
    %1566 = vmatprep.subr.bf16.mxu0 0
    %1567 = vmatpush1.bf16.msra.mxu0 0
    %1568 = vmatprep.subr.bf16.mxu0 0
    %1569 = vmatpush1.bf16.msra.mxu0 0
    %1570 = vmatprep.subr.bf16.mxu0 0
    %1571 = vmatpush1.bf16.msra.mxu0 0
    %1572 = vmatprep.subr.bf16.mxu0 0
    %1573 = vmatpush1.bf16.msra.mxu0 0
    %1574 = vmatprep.mubr.bf16.mxu0 0
    %1575 = vmatmul.mubr.bf16.gmra.mrb[0].mxu0 %v1540
    %v1576 = vpop.f32.mrb[0].mxu0
    %v1577 = vadd.f32 0.0, %v1576
    %v1578 = vpop.f32.mrb[0].mxu0
    %v1579 = vpop.f32.mrb[0].mxu0
    %v1580 = vadd.f32 0.0, %v1579
    %v1581 = vpop.f32.mrb[0].mxu0
    %1582 = vdwg.mxu0
    %1583 = vrot.lane.b32.xlu0 %v1220, 104
    %v1584 = vpop.permute.xlu0 %1583
    %1585 = vrot.lane.b32.xlu0 %v1220, 72
    %v1586 = vpop.permute.xlu0 %1585
    %v1588 = vsel %vm321, %v1584, 0
    %v1591 = vsel %vm321, %v1586, 0
    %1593 = vmatprep.subr.bf16.mxu0 0
    %1594 = vmatpush1.bf16.xpose.msra.mxu0 %v1591
    %1595 = vmatprep.subr.bf16.mxu0 0
    %1596 = vmatpush1.bf16.xpose.msra.mxu0 0
    %1597 = vmatprep.subr.bf16.mxu0 0
    %1598 = vmatpush1.bf16.xpose.msra.mxu0 0
    %1599 = vmatprep.subr.bf16.mxu0 0
    %1600 = vmatpush1.bf16.xpose.msra.mxu0 0
    %1601 = vmatprep.subr.bf16.mxu0 0
    %1602 = vmatpush1.bf16.xpose.msra.mxu0 0
    %1603 = vmatprep.subr.bf16.mxu0 0
    %1604 = vmatpush1.bf16.xpose.msra.mxu0 0
    %1605 = vmatprep.subr.bf16.mxu0 0
    %1606 = vmatpush1.bf16.xpose.msra.mxu0 0
    %1607 = vmatprep.subr.bf16.mxu0 0
    %1608 = vmatpush1.bf16.xpose.msra.mxu0 0
    %1609 = vmatprep.subr.bf16.mxu0 0
    %1610 = vmatpush1.bf16.xpose.msra.mxu0 0
    %1611 = vmatprep.subr.bf16.mxu0 0
    %1612 = vmatpush1.bf16.xpose.msra.mxu0 0
    %1613 = vmatprep.subr.bf16.mxu0 0
    %1614 = vmatpush1.bf16.xpose.msra.mxu0 0
    %1615 = vmatprep.subr.bf16.mxu0 0
    %1616 = vmatpush1.bf16.xpose.msra.mxu0 0
    %1617 = vmatprep.subr.bf16.mxu0 0
    %1618 = vmatpush1.bf16.xpose.msra.mxu0 0
    %1619 = vmatprep.subr.bf16.mxu0 0
    %1620 = vmatpush1.bf16.xpose.msra.mxu0 0
    %1621 = vmatprep.subr.bf16.mxu0 0
    %1622 = vmatpush1.bf16.xpose.msra.mxu0 0
    %1623 = vmatprep.subr.bf16.mxu0 0
    %1624 = vmatpush1.bf16.xpose.msra.mxu0 0
    %1625 = vmatprep.mubr.bf16.mxu0 0
    %1626 = vmatmul.mubr.bf16.gmra.mrb[0].mxu0 %v1588
    %v1627 = vpop.f32.mrb[0].mxu0
    %v1628 = vadd.f32 %v171, %v1627
    %v1629 = vpop.f32.mrb[0].mxu0
    %v1630 = vpop.f32.mrb[0].mxu0
    %v1631 = vadd.f32 %v172, %v1630
    %v1632 = vpop.f32.mrb[0].mxu0
    %1633 = vdwg.mxu0
    %v1634 = vsel %vm369, %v1628, -inf
    %1635 = vmax.xlane.f32.xlu0 %v1634
    %v1636 = vpop.xlane.xlu0 %1635
    %v1637 = vsel %vm369, %v1631, -inf
    %1638 = vmax.xlane.f32.xlu0 %v1637
    %v1639 = vpop.xlane.xlu0 %1638
    %v1640 = vsub.f32 %v1628, %v1636
    %v1641 = vsub.f32 %v1631, %v1639
    %v1642 = vmul.f32 %v1640, 1.442695
    %v1643 = vpow.pop %v1642
    %v1644 = vmul.f32 %v1641, 1.442695
    %v1645 = vpow.pop %v1644
    %v1646 = vsel %vm369, %v1643, 0.0
    %1647 = vadd.xlane.f32.xlu0 %v1646
    %v1648 = vpop.xlane.xlu0 %1647
    %v1649 = vsel %vm369, %v1645, 0.0
    %1650 = vadd.xlane.f32.xlu0 %v1649
    %v1651 = vpop.xlane.xlu0 %1650
    %v1652 = vrcp.pop %v1648
    %v1653 = vrcp.pop %v1651
    %v1654 = vmul.f32 %v1643, %v1652
    %v1655 = vmul.f32 %v1645, %v1653
    %v1656 = vpack.c.bf16 %v1655, %v1654
    %1657 = vrot.lane.b32.xlu0 %v1220, 40
    %v1658 = vpop.permute.xlu0 %1657
    %v1661 = vsel %vm369, %v1656, 0
    %1663 = vmatprep.subr.bf16.mxu0 0
    %1664 = vmatpush1.bf16.msra.mxu0 %v1658
    %1665 = vmatprep.subr.bf16.mxu0 0
    %1666 = vmatpush1.bf16.msra.mxu0 0
    %1667 = vmatprep.subr.bf16.mxu0 0
    %1668 = vmatpush1.bf16.msra.mxu0 0
    %1669 = vmatprep.subr.bf16.mxu0 0
    %1670 = vmatpush1.bf16.msra.mxu0 0
    %1671 = vmatprep.subr.bf16.mxu0 0
    %1672 = vmatpush1.bf16.msra.mxu0 0
    %1673 = vmatprep.subr.bf16.mxu0 0
    %1674 = vmatpush1.bf16.msra.mxu0 0
    %1675 = vmatprep.subr.bf16.mxu0 0
    %1676 = vmatpush1.bf16.msra.mxu0 0
    %1677 = vmatprep.subr.bf16.mxu0 0
    %1678 = vmatpush1.bf16.msra.mxu0 0
    %1679 = vmatprep.subr.bf16.mxu0 0
    %1680 = vmatpush1.bf16.msra.mxu0 0
    %1681 = vmatprep.subr.bf16.mxu0 0
    %1682 = vmatpush1.bf16.msra.mxu0 0
    %1683 = vmatprep.subr.bf16.mxu0 0
    %1684 = vmatpush1.bf16.msra.mxu0 0
    %1685 = vmatprep.subr.bf16.mxu0 0
    %1686 = vmatpush1.bf16.msra.mxu0 0
    %1687 = vmatprep.subr.bf16.mxu0 0
    %1688 = vmatpush1.bf16.msra.mxu0 0
    %1689 = vmatprep.subr.bf16.mxu0 0
    %1690 = vmatpush1.bf16.msra.mxu0 0
    %1691 = vmatprep.subr.bf16.mxu0 0
    %1692 = vmatpush1.bf16.msra.mxu0 0
    %1693 = vmatprep.subr.bf16.mxu0 0
    %1694 = vmatpush1.bf16.msra.mxu0 0
    %1695 = vmatprep.mubr.bf16.mxu0 0
    %1696 = vmatmul.mubr.bf16.gmra.mrb[0].mxu0 %v1661
    %v1697 = vpop.f32.mrb[0].mxu0
    %v1698 = vadd.f32 0.0, %v1697
    %v1699 = vpop.f32.mrb[0].mxu0
    %v1700 = vpop.f32.mrb[0].mxu0
    %v1701 = vadd.f32 0.0, %v1700
    %v1702 = vpop.f32.mrb[0].mxu0
    %1703 = vdwg.mxu0
    %1706 = vrot.lane.b32.xlu0 %v1456, 8
    %v1707 = vpop.permute.xlu0 %1706
    %1708 = vrot.lane.b32.xlu0 %v1459, 8
    %v1709 = vpop.permute.xlu0 %1708
    %1714 = vrot.lane.b32.xlu0 %v1577, 16
    %v1715 = vpop.permute.xlu0 %1714
    %1716 = vrot.lane.b32.xlu0 %v1580, 16
    %v1717 = vpop.permute.xlu0 %1716
    %1722 = vrot.lane.b32.xlu0 %v1698, 24
    %v1723 = vpop.permute.xlu0 %1722
    %1724 = vrot.lane.b32.xlu0 %v1701, 24
    %v1725 = vpop.permute.xlu0 %1724
    %v1728 = vsel %vm321, %v1335, %v1707
    %v1729 = vsel %vm321, %v1338, %v1709
    %v1730 = vsel %vm369, %v1728, %v1715
    %v1731 = vsel %vm369, %v1729, %v1717
    %v1732 = vsel %vm831, %v1730, %v1723
    %v1733 = vsel %vm831, %v1731, %v1725
    %v1734 = vpack.c.bf16 %v1733, %v1732
    %s1735 = scalar_lea.vmem %s7, 16
    %v1736 = vld [vmem:[%s1735] sm:$0xf]
    %v1737 = vld [vmem:[%s1735 + $0x4] sm:$0xf]
    %v1738 = vld [vmem:[%s1735 + $0x8] sm:$0xf]
    %v1739 = vld [vmem:[%s1735 + $0xc] sm:$0xf]
    %s1740 = scalar_lea.vmem %s8, 1
    %v1741 = vld [vmem:[%s1740] sm:$0x1]
    %v1743 = vlaneseq
    %v1744 = vshrl.u32 %v1743, 7
    %v1745 = vsub.s32 0, %v1744
    %v1746 = vrot.slane %v1741, %v1745
    %v1752 = vunpack.c.l.b16 %v1736
    %v1753 = vunpack.c.l.b16 %v1737
    %v1754 = vunpack.c.l.b16 %v1738
    %v1755 = vunpack.c.l.b16 %v1739
    %v1756 = vpack.c.b16 %v1753, %v1752
    %v1757 = vpack.c.b16 %v1755, %v1754
    %v1761 = vsel %vm272, %v1734, 0
    %1763 = vmatprep.subr.bf16.mxu0 0
    %1764 = vmatpush1.bf16.msra.mxu0 %v1756
    %1765 = vmatprep.subr.bf16.mxu0 0
    %1766 = vmatpush1.bf16.msra.mxu0 %v1757
    %1767 = vmatprep.subr.bf16.mxu0 0
    %1768 = vmatpush1.bf16.msra.mxu0 0
    %1769 = vmatprep.subr.bf16.mxu0 0
    %1770 = vmatpush1.bf16.msra.mxu0 0
    %1771 = vmatprep.subr.bf16.mxu0 0
    %1772 = vmatpush1.bf16.msra.mxu0 0
    %1773 = vmatprep.subr.bf16.mxu0 0
    %1774 = vmatpush1.bf16.msra.mxu0 0
    %1775 = vmatprep.subr.bf16.mxu0 0
    %1776 = vmatpush1.bf16.msra.mxu0 0
    %1777 = vmatprep.subr.bf16.mxu0 0
    %1778 = vmatpush1.bf16.msra.mxu0 0
    %1779 = vmatprep.subr.bf16.mxu0 0
    %1780 = vmatpush1.bf16.msra.mxu0 0
    %1781 = vmatprep.subr.bf16.mxu0 0
    %1782 = vmatpush1.bf16.msra.mxu0 0
    %1783 = vmatprep.subr.bf16.mxu0 0
    %1784 = vmatpush1.bf16.msra.mxu0 0
    %1785 = vmatprep.subr.bf16.mxu0 0
    %1786 = vmatpush1.bf16.msra.mxu0 0
    %1787 = vmatprep.subr.bf16.mxu0 0
    %1788 = vmatpush1.bf16.msra.mxu0 0
    %1789 = vmatprep.subr.bf16.mxu0 0
    %1790 = vmatpush1.bf16.msra.mxu0 0
    %1791 = vmatprep.subr.bf16.mxu0 0
    %1792 = vmatpush1.bf16.msra.mxu0 0
    %1793 = vmatprep.subr.bf16.mxu0 0
    %1794 = vmatpush1.bf16.msra.mxu0 0
    %1795 = vmatprep.mubr.bf16.mxu0 0
    %1796 = vmatmul.mubr.bf16.gmra.mrb[0].mxu0 %v1761
    %v1797 = vpop.f32.mrb[0].mxu0
    %v1798 = vadd.f32 %v1746, %v1797
    %v1799 = vpop.f32.mrb[0].mxu0
    %v1800 = vpop.f32.mrb[0].mxu0
    %v1801 = vadd.f32 %v1746, %v1800
    %v1802 = vpop.f32.mrb[0].mxu0
    %1803 = vdwg.mxu0
    %v1804 = vadd.f32 %v1148, %v1798
    %v1805 = vadd.f32 %v1149, %v1801
    %s1806 = scalar_lea.vmem %s9, 1
    %v1807 = vld [vmem:[%s1806] sm:$0x1]
    %s1808 = scalar_lea.vmem %s10, 1
    %v1809 = vld [vmem:[%s1808] sm:$0x1]
    %v1810 = vsel %vm272, %v1804, 0.0
    %1811 = vadd.xlane.f32.xlu0 %v1810
    %v1812 = vpop.xlane.xlu0 %1811
    %v1813 = vsel %vm272, %v1805, 0.0
    %1814 = vadd.xlane.f32.xlu0 %v1813
    %v1815 = vpop.xlane.xlu0 %1814
    %v1816 = vmul.f32 %v1812, %v912
    %v1817 = vmul.f32 %v1815, %v912
    %v1818 = vsub.f32 %v1804, %v1816
    %v1819 = vsub.f32 %v1805, %v1817
    %v1820 = vmul.f32 %v1818, %v1818
    %v1821 = vmul.f32 %v1819, %v1819
    %v1822 = vsel %vm272, %v1820, 0.0
    %1823 = vadd.xlane.f32.xlu0 %v1822
    %v1824 = vpop.xlane.xlu0 %1823
    %v1825 = vsel %vm272, %v1821, 0.0
    %1826 = vadd.xlane.f32.xlu0 %v1825
    %v1827 = vpop.xlane.xlu0 %1826
    %v1828 = vmul.f32 %v1824, %v912
    %v1829 = vmul.f32 %v1827, %v912
    %v1830 = vadd.f32 %v1828, 1e-05
    %v1831 = vadd.f32 %v1829, 1e-05
    %v1832 = vrsqrt.pop %v1830
    %v1833 = vrsqrt.pop %v1831
    %v1834 = vmul.f32 %v1818, %v1832
    %v1835 = vmul.f32 %v1819, %v1833
    %v1837 = vlaneseq
    %v1838 = vshrl.u32 %v1837, 7
    %v1839 = vsub.s32 0, %v1838
    %v1840 = vrot.slane %v1807, %v1839
    %v1842 = vmul.f32 %v1834, %v1840
    %v1843 = vmul.f32 %v1835, %v1840
    %v1845 = vlaneseq
    %v1846 = vshrl.u32 %v1845, 7
    %v1847 = vsub.s32 0, %v1846
    %v1848 = vrot.slane %v1809, %v1847
    %v1850 = vadd.f32 %v1842, %v1848
    %v1851 = vadd.f32 %v1843, %v1848
    %v1852 = vpack.c.bf16 %v1851, %v1850
    %s1853 = scalar_lea.vmem %s13, 16
    %v1854 = vld [vmem:[%s1853] sm:$0xf]
    %v1855 = vld [vmem:[%s1853 + $0x4] sm:$0xf]
    %v1856 = vld [vmem:[%s1853 + $0x8] sm:$0xf]
    %v1857 = vld [vmem:[%s1853 + $0xc] sm:$0xf]
    %s1858 = scalar_lea.vmem [#allocation14], 1
    %v1859 = vld [vmem:[%s1858] sm:$0x1]
    %v1861 = vlaneseq
    %v1862 = vshrl.u32 %v1861, 7
    %v1863 = vsub.s32 0, %v1862
    %v1864 = vrot.slane %v1859, %v1863
    %v1870 = vunpack.c.l.b16 %v1854
    %v1871 = vunpack.c.l.b16 %v1855
    %v1872 = vunpack.c.l.b16 %v1856
    %v1873 = vunpack.c.l.b16 %v1857
    %v1874 = vpack.c.b16 %v1871, %v1870
    %v1875 = vpack.c.b16 %v1873, %v1872
    %v1879 = vsel %vm272, %v1852, 0
    %1881 = vmatprep.subr.bf16.mxu0 0
    %1882 = vmatpush1.bf16.msra.mxu0 %v1874
    %1883 = vmatprep.subr.bf16.mxu0 0
    %1884 = vmatpush1.bf16.msra.mxu0 %v1875
    %1885 = vmatprep.subr.bf16.mxu0 0
    %1886 = vmatpush1.bf16.msra.mxu0 0
    %1887 = vmatprep.subr.bf16.mxu0 0
    %1888 = vmatpush1.bf16.msra.mxu0 0
    %1889 = vmatprep.subr.bf16.mxu0 0
    %1890 = vmatpush1.bf16.msra.mxu0 0
    %1891 = vmatprep.subr.bf16.mxu0 0
    %1892 = vmatpush1.bf16.msra.mxu0 0
    %1893 = vmatprep.subr.bf16.mxu0 0
    %1894 = vmatpush1.bf16.msra.mxu0 0
    %1895 = vmatprep.subr.bf16.mxu0 0
    %1896 = vmatpush1.bf16.msra.mxu0 0
    %1897 = vmatprep.subr.bf16.mxu0 0
    %1898 = vmatpush1.bf16.msra.mxu0 0
    %1899 = vmatprep.subr.bf16.mxu0 0
    %1900 = vmatpush1.bf16.msra.mxu0 0
    %1901 = vmatprep.subr.bf16.mxu0 0
    %1902 = vmatpush1.bf16.msra.mxu0 0
    %1903 = vmatprep.subr.bf16.mxu0 0
    %1904 = vmatpush1.bf16.msra.mxu0 0
    %1905 = vmatprep.subr.bf16.mxu0 0
    %1906 = vmatpush1.bf16.msra.mxu0 0
    %1907 = vmatprep.subr.bf16.mxu0 0
    %1908 = vmatpush1.bf16.msra.mxu0 0
    %1909 = vmatprep.subr.bf16.mxu0 0
    %1910 = vmatpush1.bf16.msra.mxu0 0
    %1911 = vmatprep.subr.bf16.mxu0 0
    %1912 = vmatpush1.bf16.msra.mxu0 0
    %1913 = vmatprep.mubr.bf16.mxu0 0
    %1914 = vmatmul.mubr.bf16.gmra.mrb[0].mxu0 %v1879
    %v1915 = vpop.f32.mrb[0].mxu0
    %v1916 = vadd.f32 %v1864, %v1915
    %v1917 = vpop.f32.mrb[0].mxu0
    %v1918 = vpop.f32.mrb[0].mxu0
    %v1919 = vadd.f32 %v1864, %v1918
    %v1920 = vpop.f32.mrb[0].mxu0
    %1921 = vdwg.mxu0
    %v1922 = vmax.f32 %v1916, 0.0
    %v1923 = vmax.f32 %v1919, 0.0
    %v1924 = vpack.c.bf16 %v1923, %v1922
    %s1925 = scalar_lea.vmem %s15, 32
    %v1926 = vld [vmem:[%s1925] sm:$0xf]
    %v1927 = vld [vmem:[%s1925 + $0x4] sm:$0xf]
    %v1928 = vld [vmem:[%s1925 + $0x8] sm:$0xf]
    %v1929 = vld [vmem:[%s1925 + $0xc] sm:$0xf]
    %v1930 = vld [vmem:[%s1925 + $0x10] sm:$0xf]
    %v1931 = vld [vmem:[%s1925 + $0x14] sm:$0xf]
    %v1932 = vld [vmem:[%s1925 + $0x18] sm:$0xf]
    %v1933 = vld [vmem:[%s1925 + $0x1c] sm:$0xf]
    %s1934 = scalar_lea.vmem %s16, 1
    %v1935 = vld [vmem:[%s1934] sm:$0x1]
    %v1937 = vlaneseq
    %v1938 = vshrl.u32 %v1937, 7
    %v1939 = vsub.s32 0, %v1938
    %v1940 = vrot.slane %v1935, %v1939
    %v1950 = vunpack.c.l.b16 %v1926
    %v1951 = vunpack.c.l.b16 %v1927
    %v1952 = vunpack.c.l.b16 %v1928
    %v1953 = vunpack.c.l.b16 %v1929
    %v1954 = vunpack.c.l.b16 %v1930
    %v1955 = vunpack.c.l.b16 %v1931
    %v1956 = vunpack.c.l.b16 %v1932
    %v1957 = vunpack.c.l.b16 %v1933
    %v1958 = vpack.c.b16 %v1951, %v1950
    %v1959 = vpack.c.b16 %v1953, %v1952
    %v1960 = vpack.c.b16 %v1955, %v1954
    %v1961 = vpack.c.b16 %v1957, %v1956
    %v1967 = vsel %vm1059, %v1924, 0
    %1969 = vmatprep.subr.bf16.mxu0 0
    %1970 = vmatpush1.bf16.msra.mxu0 %v1958
    %1971 = vmatprep.subr.bf16.mxu0 0
    %1972 = vmatpush1.bf16.msra.mxu0 %v1959
    %1973 = vmatprep.subr.bf16.mxu0 0
    %1974 = vmatpush1.bf16.msra.mxu0 %v1960
    %1975 = vmatprep.subr.bf16.mxu0 0
    %1976 = vmatpush1.bf16.msra.mxu0 %v1961
    %1977 = vmatprep.subr.bf16.mxu0 0
    %1978 = vmatpush1.bf16.msra.mxu0 0
    %1979 = vmatprep.subr.bf16.mxu0 0
    %1980 = vmatpush1.bf16.msra.mxu0 0
    %1981 = vmatprep.subr.bf16.mxu0 0
    %1982 = vmatpush1.bf16.msra.mxu0 0
    %1983 = vmatprep.subr.bf16.mxu0 0
    %1984 = vmatpush1.bf16.msra.mxu0 0
    %1985 = vmatprep.subr.bf16.mxu0 0
    %1986 = vmatpush1.bf16.msra.mxu0 0
    %1987 = vmatprep.subr.bf16.mxu0 0
    %1988 = vmatpush1.bf16.msra.mxu0 0
    %1989 = vmatprep.subr.bf16.mxu0 0
    %1990 = vmatpush1.bf16.msra.mxu0 0
    %1991 = vmatprep.subr.bf16.mxu0 0
    %1992 = vmatpush1.bf16.msra.mxu0 0
    %1993 = vmatprep.subr.bf16.mxu0 0
    %1994 = vmatpush1.bf16.msra.mxu0 0
    %1995 = vmatprep.subr.bf16.mxu0 0
    %1996 = vmatpush1.bf16.msra.mxu0 0
    %1997 = vmatprep.subr.bf16.mxu0 0
    %1998 = vmatpush1.bf16.msra.mxu0 0
    %1999 = vmatprep.subr.bf16.mxu0 0
    %2000 = vmatpush1.bf16.msra.mxu0 0
    %2001 = vmatprep.mubr.bf16.mxu0 0
    %2002 = vmatmul.mubr.bf16.gmra.mrb[0].mxu0 %v1967
    %v2003 = vpop.f32.mrb[0].mxu0
    %v2004 = vadd.f32 %v1940, %v2003
    %v2005 = vpop.f32.mrb[0].mxu0
    %v2006 = vpop.f32.mrb[0].mxu0
    %v2007 = vadd.f32 %v1940, %v2006
    %v2008 = vpop.f32.mrb[0].mxu0
    %2009 = vdwg.mxu0
    %v2010 = vadd.f32 %v1850, %v2004
    %v2011 = vadd.f32 %v1851, %v2007
    %s2012 = scalar_lea.vmem [#allocation11], 1
    %v2013 = vld [vmem:[%s2012] sm:$0x1]
    %s2014 = scalar_lea.vmem [#allocation13], 1
    %v2015 = vld [vmem:[%s2014] sm:$0x1]
    %v2016 = vsel %vm272, %v2010, 0.0
    %2017 = vadd.xlane.f32.xlu0 %v2016
    %v2018 = vpop.xlane.xlu0 %2017
    %v2019 = vsel %vm272, %v2011, 0.0
    %2020 = vadd.xlane.f32.xlu0 %v2019
    %v2021 = vpop.xlane.xlu0 %2020
    %v2022 = vmul.f32 %v2018, %v912
    %v2023 = vmul.f32 %v2021, %v912
    %v2024 = vsub.f32 %v2010, %v2022
    %v2025 = vsub.f32 %v2011, %v2023
    %v2026 = vmul.f32 %v2024, %v2024
    %v2027 = vmul.f32 %v2025, %v2025
    %v2028 = vsel %vm272, %v2026, 0.0
    %2029 = vadd.xlane.f32.xlu0 %v2028
    %v2030 = vpop.xlane.xlu0 %2029
    %v2031 = vsel %vm272, %v2027, 0.0
    %2032 = vadd.xlane.f32.xlu0 %v2031
    %v2033 = vpop.xlane.xlu0 %2032
    %v2034 = vmul.f32 %v2030, %v912
    %v2035 = vmul.f32 %v2033, %v912
    %v2036 = vadd.f32 %v2034, 1e-05
    %v2037 = vadd.f32 %v2035, 1e-05
    %v2038 = vrsqrt.pop %v2036
    %v2039 = vrsqrt.pop %v2037
    %v2040 = vmul.f32 %v2024, %v2038
    %v2041 = vmul.f32 %v2025, %v2039
    %v2043 = vlaneseq
    %v2044 = vshrl.u32 %v2043, 7
    %v2045 = vsub.s32 0, %v2044
    %v2046 = vrot.slane %v2013, %v2045
    %v2048 = vmul.f32 %v2040, %v2046
    %v2049 = vmul.f32 %v2041, %v2046
    %v2051 = vlaneseq
    %v2052 = vshrl.u32 %v2051, 7
    %v2053 = vsub.s32 0, %v2052
    %v2054 = vrot.slane %v2015, %v2053
    %v2056 = vadd.f32 %v2048, %v2054
    %v2057 = vadd.f32 %v2049, %v2054
    %v2058 = vpack.c.bf16 %v2057, %v2056
    %v2059 = vld [vmem:[%s17] sm:$0xf]
    %v2060 = vld [vmem:[%s17 + $0x4] sm:$0xf]
    %v2061 = vld [vmem:[%s17 + $0x8] sm:$0xf]
    %v2062 = vld [vmem:[%s17 + $0xc] sm:$0xf]
    %v2063 = vld [vmem:[%s18] sm:$0x1]
    %v2065 = vlaneseq
    %v2066 = vshrl.u32 %v2065, 7
    %v2067 = vsub.s32 0, %v2066
    %v2068 = vrot.slane %v2063, %v2067
    %v2074 = vunpack.c.l.b16 %v2059
    %v2075 = vunpack.c.l.b16 %v2060
    %v2076 = vunpack.c.l.b16 %v2061
    %v2077 = vunpack.c.l.b16 %v2062
    %v2078 = vpack.c.b16 %v2075, %v2074
    %v2079 = vpack.c.b16 %v2077, %v2076
    %v2083 = vsel %vm272, %v2058, 0
    %2085 = vmatprep.subr.bf16.mxu0 0
    %2086 = vmatpush1.bf16.msra.mxu0 %v2078
    %2087 = vmatprep.subr.bf16.mxu0 0
    %2088 = vmatpush1.bf16.msra.mxu0 %v2079
    %2089 = vmatprep.subr.bf16.mxu0 0
    %2090 = vmatpush1.bf16.msra.mxu0 0
    %2091 = vmatprep.subr.bf16.mxu0 0
    %2092 = vmatpush1.bf16.msra.mxu0 0
    %2093 = vmatprep.subr.bf16.mxu0 0
    %2094 = vmatpush1.bf16.msra.mxu0 0
    %2095 = vmatprep.subr.bf16.mxu0 0
    %2096 = vmatpush1.bf16.msra.mxu0 0
    %2097 = vmatprep.subr.bf16.mxu0 0
    %2098 = vmatpush1.bf16.msra.mxu0 0
    %2099 = vmatprep.subr.bf16.mxu0 0
    %2100 = vmatpush1.bf16.msra.mxu0 0
    %2101 = vmatprep.subr.bf16.mxu0 0
    %2102 = vmatpush1.bf16.msra.mxu0 0
    %2103 = vmatprep.subr.bf16.mxu0 0
    %2104 = vmatpush1.bf16.msra.mxu0 0
    %2105 = vmatprep.subr.bf16.mxu0 0
    %2106 = vmatpush1.bf16.msra.mxu0 0
    %2107 = vmatprep.subr.bf16.mxu0 0
    %2108 = vmatpush1.bf16.msra.mxu0 0
    %2109 = vmatprep.subr.bf16.mxu0 0
    %2110 = vmatpush1.bf16.msra.mxu0 0
    %2111 = vmatprep.subr.bf16.mxu0 0
    %2112 = vmatpush1.bf16.msra.mxu0 0
    %2113 = vmatprep.subr.bf16.mxu0 0
    %2114 = vmatpush1.bf16.msra.mxu0 0
    %2115 = vmatprep.subr.bf16.mxu0 0
    %2116 = vmatpush1.bf16.msra.mxu0 0
    %2117 = vmatprep.mubr.bf16.mxu0 0
    %2118 = vmatmul.mubr.bf16.gmra.mrb[0].mxu0 %v2083
    %v2119 = vpop.f32.mrb[0].mxu0
    %v2120 = vadd.f32 %v2068, %v2119
    %v2121 = vpop.f32.mrb[0].mxu0
    %v2122 = vpop.f32.mrb[0].mxu0
    %v2123 = vadd.f32 %v2068, %v2122
    %v2124 = vpop.f32.mrb[0].mxu0
    %2125 = vdwg.mxu0
    %2126 = vst [vmem:[#allocation16] sm:$0xff] %v2120
    %2127 = vst [vmem:[#allocation16 + $0x8] sm:$0xff] %v2123
    // Predicated region
    $region110: #{tpu_custom_call.1} parent=1 // pred_check
      _
    $region111: #{tpu_custom_call.1} parent=1 // pred_check_branch
      %2129 = sbr.rel (0) target = $region113
    $region112: #{tpu_custom_call.1} parent=1 // pred_region
      %s2131 = ssub.s32 256, 256
      %2132 = vsyncadd [#allocation4], %s2131
      %s2133 = sshll.u32 [#allocation16], 4
      %s2134 = int_to_ptr.vmem [resolvable:$true] %s2133
      %2139 = dma.vmem_to_hbm [thread:$0]  %s2134, 256, %s19, [#allocation4], 128, 128, 8
    $region113: #{tpu_custom_call.1} parent=1 // pred_fallthru
      _
    // Predicated region
    $region114: #{tpu_custom_call.1} parent=1 // pred_check
      _
    $region115: #{tpu_custom_call.1} parent=1 // pred_check_branch
      %2141 = sbr.rel (0) target = $region117
    $region116: #{tpu_custom_call.1} parent=1 // pred_region
      %2142 = dma.done [#allocation4], 256
    $region117: #{tpu_custom_call.1} parent=1 // pred_fallthru
      _
    %2143 = vsyncpa [#allocation3], 1
    %2144 = vsyncpa [#allocation6], 1
    %2145 = vsyncpa [#allocation9], 1
    %2146 = vsyncpa [#allocation12], 1
    %2147 = vsyncpa [#allocation15], 1
    %2148 = vsyncpa [#allocation4], 1

</llo_original>
